<compile_context>
chip_gen: v7x
topology: tpu7x:2x2x1
jax: 0.10.0
libtpu: 0.0.40
codegen_flags: <defaults>
</compile_context>

<pallas_src>
import functools
import math

import numpy as np
import jax
import jax.numpy as jnp
from jax.experimental import pallas as pl
from jax.experimental.pallas import tpu as pltpu

_MXU_DTYPE = jnp.bfloat16  # matmul-operand dtype (f32 accumulate). f32 = exact.


def _is_pow2(v):
    return v > 0 and (v & (v - 1)) == 0


# ----------------------------------------------------------------------------
# Fused kernel: conv1 -> ReLU -> conv2 -> avgpool  +  avgpool -> 1x1 conv -> add
# ----------------------------------------------------------------------------
def _dis_block_kernel(x_ref, pool_ref, w1_ref, b1_ref, w2_ref, b2_ref,
                      wsc_ref, bsc_ref, o_ref, s1_ref, s2_ref, *, H, W):
    """Layouts (per batch tile of NB images, M = NB*H*W, Mp = NB*Ho*Wo):
       x_ref   (Cin_pad, M) f32      pool_ref (M, Mp) mxu-dtype (block-diag, 0.25)
       w1_ref  (Cout, 9*Cin_pad)     w2_ref   (Cout, 9*Cout)   wsc_ref (Cout, Cin_pad)
       b*_ref  (Cout, 1) f32         o_ref    (Cout, Mp) f32
       s1_ref  (9*Cin_pad, M) f32    s2_ref   (9*Cout, M) f32  (tap-stacked scratch)
    """
    M = x_ref.shape[1]
    x = x_ref[...]                                        # (Cin_pad, M) f32

    # ---- padding-validity masks: built once, shared by both convs ----------
    pos = jax.lax.broadcasted_iota(jnp.int32, (1, M), 1)
    if _is_pow2(W):
        col = pos & (W - 1)
        rowq = pos >> (W.bit_length() - 1)
    else:
        col = pos % W
        rowq = pos // W
    row = (rowq & (H - 1)) if _is_pow2(H) else (rowq % H)
    row_masks = {-1: row >= 1, 0: None, 1: row <= H - 2}
    col_masks = {-1: col >= 1, 0: None, 1: col <= W - 2}

    def stack_taps(h, s_ref):
        """Write the 9 shifted+zero-padded taps of h into s_ref (tap-major)."""
        c = h.shape[0]
        row_shifted = []
        for dh in (-1, 0, 1):                             # roll once per dh (+-W)
            y = h if dh == 0 else pltpu.roll(h, (-dh * W) % M, axis=1)
            rm = row_masks[dh]
            if rm is not None:
                y = jnp.where(rm, y, 0.0)
            row_shifted.append(y)
        t = 0
        for y in row_shifted:
            for dw in (-1, 0, 1):                         # derive +-1 column taps
                z = y if dw == 0 else pltpu.roll(y, (-dw) % M, axis=1)
                cm = col_masks[dw]
                if cm is not None:
                    z = jnp.where(cm, z, 0.0)
                s_ref[t * c:(t + 1) * c, :] = z           # rotate -> scratch row
                t += 1

    pool = pool_ref[...]                                  # (M, Mp) mxu-dtype

    # ---- residual path: c1 -> ReLU -> c2 (no bias) -> avgpool -> +b2 -------
    stack_taps(x, s1_ref)
    h1 = jnp.dot(w1_ref[...], s1_ref[...].astype(w1_ref.dtype),
                 preferred_element_type=jnp.float32) + b1_ref[...]
    h1 = jnp.maximum(h1, 0.0)                             # (Cout, M) f32

    stack_taps(h1, s2_ref)
    h2 = jnp.dot(w2_ref[...], s2_ref[...].astype(w2_ref.dtype),
                 preferred_element_type=jnp.float32)      # (Cout, M) f32
    res = jnp.dot(h2.astype(pool.dtype), pool,
                  preferred_element_type=jnp.float32) + b2_ref[...]   # (Cout, Mp)

    # ---- shortcut path: avgpool -> 1x1 conv (pool first => 4x less GEMM) ---
    xp = jnp.dot(x.astype(pool.dtype), pool,
                 preferred_element_type=jnp.float32)      # (Cin_pad, Mp)
    sc = jnp.dot(wsc_ref[...], xp.astype(wsc_ref.dtype),
                 preferred_element_type=jnp.float32) + bsc_ref[...]   # (Cout, Mp)

    o_ref[...] = res + sc                                 # lane-dense store


# ----------------------------------------------------------------------------
# Host-side constants / layout plumbing
# ----------------------------------------------------------------------------
def _round_up(v, m):
    return ((v + m - 1) // m) * m


@functools.lru_cache(maxsize=None)
def _pool_matrix_np(nb, H, W):
    """Per-tile block-diagonal 2x2/stride-2 avg-pool matrix (NB*H*W, NB*Ho*Wo)."""
    Ho, Wo = H // 2, W // 2
    Mt, Mpt = nb * H * W, nb * Ho * Wo
    pool = np.zeros((Mt, Mpt), np.float32)
    q = np.arange(Mpt)
    n = q // (Ho * Wo)
    r = q % (Ho * Wo)
    oi, oj = r // Wo, r % Wo
    base = n * H * W + (2 * oi) * W + 2 * oj
    for a in (0, 1):
        for b in (0, 1):
            pool[base + a * W + b, q] = 0.25
    return pool


def _pick_batch_tile(n, lanes_per_img):
    """Smallest divisor of n whose pooled-output lane width is a multiple of 128."""
    for nb in range(1, n + 1):
        if n % nb == 0 and (nb * lanes_per_img) % 128 == 0:
            return nb
    return n  # fallback: whole batch (block == full array dims is always legal)


def _stack_conv3x3_weights(w, cin_pad):
    """(Cout, Cin, 3, 3) -> (Cout, 9*cin_pad) tap-major, channel-minor, mxu dtype."""
    cout, cin, kh, kw = w.shape
    w = jnp.pad(w, ((0, 0), (0, cin_pad - cin), (0, 0), (0, 0)))
    return jnp.transpose(w, (0, 2, 3, 1)).reshape(cout, kh * kw * cin_pad).astype(_MXU_DTYPE)


@jax.jit
def optimized_dis_block_forward(params, x_nchw):
    """x_nchw: (N, Cin, H, W) f32  ->  (N, Cout, H//2, W//2) f32."""
    x = x_nchw.astype(jnp.float32)
    N, Cin, H, W = x.shape
    Cout = params["c1.w"].shape[0]
    assert H % 2 == 0 and W % 2 == 0
    assert Cout % 8 == 0, "out_channels must be a multiple of 8"
    Ho, Wo = H // 2, W // 2
    cin_pad = _round_up(Cin, 8)
    NB = _pick_batch_tile(N, Ho * Wo)          # images per grid step
    Mt, Mpt = NB * H * W, NB * Ho * Wo

    # lane-dense (C, N*H*W) activation layout (channels on sublanes)
    x_flat = jnp.transpose(x, (1, 0, 2, 3)).reshape(Cin, N * H * W)
    x_flat = jnp.pad(x_flat, ((0, cin_pad - Cin), (0, 0)))

    w1s = _stack_conv3x3_weights(params["c1.w"], cin_pad)       # (Cout, 9*cin_pad)
    w2s = _stack_conv3x3_weights(params["c2.w"], Cout)          # (Cout, 9*Cout)
    wsc = jnp.pad(params["c_sc.w"].reshape(Cout, Cin),
                  ((0, 0), (0, cin_pad - Cin))).astype(_MXU_DTYPE)
    b1 = params["c1.b"].reshape(Cout, 1).astype(jnp.float32)
    b2 = params["c2.b"].reshape(Cout, 1).astype(jnp.float32)
    bsc = params["c_sc.b"].reshape(Cout, 1).astype(jnp.float32)
    pool = jnp.asarray(_pool_matrix_np(NB, H, W), dtype=_MXU_DTYPE)

    const = lambda b: (0, 0)   # weights/pool: fetched once, reused across the grid
    in_specs = [
        pl.BlockSpec((cin_pad, Mt), lambda b: (0, b)),          # x (per batch tile)
        pl.BlockSpec((Mt, Mpt), const),                         # pool
        pl.BlockSpec((Cout, 9 * cin_pad), const),               # w1
        pl.BlockSpec((Cout, 1), const),                         # b1
        pl.BlockSpec((Cout, 9 * Cout), const),                  # w2
        pl.BlockSpec((Cout, 1), const),                         # b2
        pl.BlockSpec((Cout, cin_pad), const),                   # wsc
        pl.BlockSpec((Cout, 1), const),                         # bsc
    ]
    out_specs = pl.BlockSpec((Cout, Mpt), lambda b: (0, b))

    itemsz = np.dtype(_MXU_DTYPE).itemsize
    flops = int(2 * N * H * W * Cout * 9 * (cin_pad + Cout)             # convs
                + 2 * (N // NB) * (Cout + cin_pad) * Mt * Mpt           # pooling GEMMs
                + 2 * N * Ho * Wo * Cout * cin_pad)                     # 1x1 shortcut
    bytes_acc = int(x_flat.size * 4 + N * Ho * Wo * Cout * 4
                    + (w1s.size + w2s.size + wsc.size + pool.size) * itemsz
                    + 3 * Cout * 4)

    out = pl.pallas_call(
        functools.partial(_dis_block_kernel, H=H, W=W),
        grid=(N // NB,),
        out_shape=jax.ShapeDtypeStruct((Cout, N * Ho * Wo), jnp.float32),
        in_specs=in_specs,
        out_specs=out_specs,
        scratch_shapes=[pltpu.VMEM((9 * cin_pad, Mt), jnp.float32),   # conv1 tap stack
                        pltpu.VMEM((9 * Cout, Mt), jnp.float32)],     # conv2 tap stack
        compiler_params=pltpu.CompilerParams(
            dimension_semantics=("parallel",),
            vmem_limit_bytes=32 * 1024 * 1024),
        cost_estimate=pl.CostEstimate(flops=flops, transcendentals=0,
                                      bytes_accessed=bytes_acc),
    )(x_flat, pool, w1s, b1, w2s, b2, wsc, bsc)

    # back to NCHW to match the PyTorch module's output layout
    return jnp.transpose(out.reshape(Cout, N, Ho, Wo), (1, 0, 2, 3))


# ----------------------------------------------------------------------------
# Parameter init (PyTorch Conv2d default: uniform(+-1/sqrt(fan_in)))
# ----------------------------------------------------------------------------
def init_optimized_dis_block_params(key, in_channels, out_channels):
    ks = jax.random.split(key, 6)

    def conv(kw_key, kb_key, cout, cin, k):
        fan_in = cin * k * k
        bound = 1.0 / math.sqrt(fan_in)
        w = jax.random.uniform(kw_key, (cout, cin, k, k), jnp.float32, -bound, bound)
        b = jax.random.uniform(kb_key, (cout,), jnp.float32, -bound, bound)
        return w, b

    p = {}
    p["c1.w"], p["c1.b"] = conv(ks[0], ks[1], out_channels, in_channels, 3)
    p["c2.w"], p["c2.b"] = conv(ks[2], ks[3], out_channels, out_channels, 3)
    p["c_sc.w"], p["c_sc.b"] = conv(ks[4], ks[5], out_channels, in_channels, 1)
    return p


# ----------------------------------------------------------------------------
# Pure-JAX reference (for a loose bf16-tolerance self-check)
# ----------------------------------------------------------------------------
def _reference_forward(params, x):
    dn = ("NCHW", "OIHW", "NCHW")

    def pool2(t):
        n, c, hh, ww = t.shape
        return t.reshape(n, c, hh // 2, 2, ww // 2, 2).mean(axis=(3, 5))

    h = jax.lax.conv_general_dilated(x, params["c1.w"], (1, 1), ((1, 1), (1, 1)),
                                     dimension_numbers=dn)
    h = h + params["c1.b"][None, :, None, None]
    h = jnp.maximum(h, 0.0)
    h = jax.lax.conv_general_dilated(h, params["c2.w"], (1, 1), ((1, 1), (1, 1)),
                                     dimension_numbers=dn)
    h = h + params["c2.b"][None, :, None, None]
    res = pool2(h)
    sc = jax.lax.conv_general_dilated(pool2(x), params["c_sc.w"], (1, 1),
                                      ((0, 0), (0, 0)), dimension_numbers=dn)
    sc = sc + params["c_sc.b"][None, :, None, None]
    return res + sc


# ----------------------------------------------------------------------------
if __name__ == "__main__":
    key = jax.random.PRNGKey(0)
    k_params, k_x = jax.random.split(key)

    in_ch, out_ch = 3, 16                       # CIFAR input channels, small df_dim
    x = jax.random.normal(k_x, (2, in_ch, 16, 16), dtype=jnp.float32)  # NCHW

    params = init_optimized_dis_block_params(k_params, in_ch, out_ch)
    out = jax.block_until_ready(optimized_dis_block_forward(params, x))

    assert out.shape == (2, out_ch, 8, 8) and out.dtype == jnp.float32
    ref = jax.block_until_ready(_reference_forward(params, x))
    # generous tolerance: bf16 matmul operands (f32 accumulate) vs f32 reference
    np.testing.assert_allclose(np.asarray(out), np.asarray(ref), rtol=5e-2, atol=2e-1)
    print("KERNEL_OK")
</pallas_src>

<mosaic_0001>
module attributes {stable_mosaic.version = 11 : i64} {
  func.func @_dis_block_kernel(%arg0: i32, %arg1: memref<8x512xf32, #tpu.memory_space<vmem>>, %arg2: memref<512x128xbf16, #tpu.memory_space<vmem>>, %arg3: memref<16x72xbf16, #tpu.memory_space<vmem>>, %arg4: memref<16x1xf32, #tpu.memory_space<vmem>>, %arg5: memref<16x144xbf16, #tpu.memory_space<vmem>>, %arg6: memref<16x1xf32, #tpu.memory_space<vmem>>, %arg7: memref<16x8xbf16, #tpu.memory_space<vmem>>, %arg8: memref<16x1xf32, #tpu.memory_space<vmem>>, %arg9: memref<16x128xf32, #tpu.memory_space<vmem>>, %arg10: memref<72x512xf32, #tpu.memory_space<vmem>>, %arg11: memref<144x512xf32, #tpu.memory_space<vmem>>) attributes {dimension_semantics = [#tpu.dimension_semantics<parallel>], iteration_bounds = array<i64: 1>, scalar_prefetch = 0 : i64, scratch_operands = 2 : i64, tpu.core_type = #tpu.core_type<tc>, window_params = [{transform_indices = @transform_0, window_bounds = array<i64: 8, 512>}, {pipeline_mode = #tpu.pipeline_mode<synchronous>, transform_indices = @transform_1, window_bounds = array<i64: 512, 128>}, {pipeline_mode = #tpu.pipeline_mode<synchronous>, transform_indices = @transform_2, window_bounds = array<i64: 16, 72>}, {pipeline_mode = #tpu.pipeline_mode<synchronous>, transform_indices = @transform_3, window_bounds = array<i64: 16, 1>}, {pipeline_mode = #tpu.pipeline_mode<synchronous>, transform_indices = @transform_4, window_bounds = array<i64: 16, 144>}, {pipeline_mode = #tpu.pipeline_mode<synchronous>, transform_indices = @transform_5, window_bounds = array<i64: 16, 1>}, {pipeline_mode = #tpu.pipeline_mode<synchronous>, transform_indices = @transform_6, window_bounds = array<i64: 16, 8>}, {pipeline_mode = #tpu.pipeline_mode<synchronous>, transform_indices = @transform_7, window_bounds = array<i64: 16, 1>}, {transform_indices = @transform_8, window_bounds = array<i64: 16, 128>}]} {
    %c0 = arith.constant 0 : index
    %c0_0 = arith.constant 0 : index
    %0 = vector.load %arg1[%c0, %c0_0] : memref<8x512xf32, #tpu.memory_space<vmem>>, vector<8x512xf32>
    %1 = tpu.iota {dimensions = array<i32: 1>} : vector<1x512xi32>
    %c15_i32 = arith.constant 15 : i32
    %2 = vector.broadcast %c15_i32 : i32 to vector<1x512xi32>
    %3 = arith.andi %1, %2 : vector<1x512xi32>
    %c4_i32 = arith.constant 4 : i32
    %4 = vector.broadcast %c4_i32 : i32 to vector<1x512xi32>
    %5 = arith.shrsi %1, %4 : vector<1x512xi32>
    %c15_i32_1 = arith.constant 15 : i32
    %6 = vector.broadcast %c15_i32_1 : i32 to vector<1x512xi32>
    %7 = arith.andi %5, %6 : vector<1x512xi32>
    %c1_i32 = arith.constant 1 : i32
    %8 = vector.broadcast %c1_i32 : i32 to vector<1x512xi32>
    %9 = arith.cmpi sge, %7, %8 : vector<1x512xi32>
    %c14_i32 = arith.constant 14 : i32
    %10 = vector.broadcast %c14_i32 : i32 to vector<1x512xi32>
    %11 = arith.cmpi sle, %7, %10 : vector<1x512xi32>
    %c1_i32_2 = arith.constant 1 : i32
    %12 = vector.broadcast %c1_i32_2 : i32 to vector<1x512xi32>
    %13 = arith.cmpi sge, %3, %12 : vector<1x512xi32>
    %c14_i32_3 = arith.constant 14 : i32
    %14 = vector.broadcast %c14_i32_3 : i32 to vector<1x512xi32>
    %15 = arith.cmpi sle, %3, %14 : vector<1x512xi32>
    %c0_4 = arith.constant 0 : index
    %c0_5 = arith.constant 0 : index
    %16 = vector.load %arg2[%c0_4, %c0_5] : memref<512x128xbf16, #tpu.memory_space<vmem>>, vector<512x128xbf16>
    %c16_i32 = arith.constant 16 : i32
    %17 = tpu.dynamic_rotate %0 by %c16_i32 dim 1 : vector<8x512xf32>, i32 -> vector<8x512xf32>
    %cst = arith.constant 0.000000e+00 : f32
    %18 = vector.shape_cast %9 : vector<1x512xi1> to vector<1x512xi1>
    %19 = vector.broadcast %18 : vector<1x512xi1> to vector<8x512xi1>
    %20 = vector.broadcast %cst : f32 to vector<8x512xf32>
    %21 = arith.select %19, %17, %20 : vector<8x512xi1>, vector<8x512xf32>
    %c496_i32 = arith.constant 496 : i32
    %22 = tpu.dynamic_rotate %0 by %c496_i32 dim 1 : vector<8x512xf32>, i32 -> vector<8x512xf32>
    %cst_6 = arith.constant 0.000000e+00 : f32
    %23 = vector.shape_cast %11 : vector<1x512xi1> to vector<1x512xi1>
    %24 = vector.broadcast %23 : vector<1x512xi1> to vector<8x512xi1>
    %25 = vector.broadcast %cst_6 : f32 to vector<8x512xf32>
    %26 = arith.select %24, %22, %25 : vector<8x512xi1>, vector<8x512xf32>
    %c1_i32_7 = arith.constant 1 : i32
    %27 = tpu.dynamic_rotate %21 by %c1_i32_7 dim 1 : vector<8x512xf32>, i32 -> vector<8x512xf32>
    %cst_8 = arith.constant 0.000000e+00 : f32
    %28 = vector.shape_cast %13 : vector<1x512xi1> to vector<1x512xi1>
    %29 = vector.broadcast %28 : vector<1x512xi1> to vector<8x512xi1>
    %30 = vector.broadcast %cst_8 : f32 to vector<8x512xf32>
    %31 = arith.select %29, %27, %30 : vector<8x512xi1>, vector<8x512xf32>
    %c0_9 = arith.constant 0 : index
    %c0_10 = arith.constant 0 : index
    %32 = vector.load %arg10[%c0_9, %c0_10] : memref<72x512xf32, #tpu.memory_space<vmem>>, vector<8x512xf32>
    tpu.vector_store %arg10[%c0_9, %c0_10], %31 {strides = array<i32>} : memref<72x512xf32, #tpu.memory_space<vmem>>, vector<8x512xf32>,
    %c8 = arith.constant 8 : index
    %c0_11 = arith.constant 0 : index
    %33 = vector.load %arg10[%c8, %c0_11] : memref<72x512xf32, #tpu.memory_space<vmem>>, vector<8x512xf32>
    tpu.vector_store %arg10[%c8, %c0_11], %21 {strides = array<i32>} : memref<72x512xf32, #tpu.memory_space<vmem>>, vector<8x512xf32>,
    %c511_i32 = arith.constant 511 : i32
    %34 = tpu.dynamic_rotate %21 by %c511_i32 dim 1 : vector<8x512xf32>, i32 -> vector<8x512xf32>
    %cst_12 = arith.constant 0.000000e+00 : f32
    %35 = vector.shape_cast %15 : vector<1x512xi1> to vector<1x512xi1>
    %36 = vector.broadcast %35 : vector<1x512xi1> to vector<8x512xi1>
    %37 = vector.broadcast %cst_12 : f32 to vector<8x512xf32>
    %38 = arith.select %36, %34, %37 : vector<8x512xi1>, vector<8x512xf32>
    %c16 = arith.constant 16 : index
    %c0_13 = arith.constant 0 : index
    %39 = vector.load %arg10[%c16, %c0_13] : memref<72x512xf32, #tpu.memory_space<vmem>>, vector<8x512xf32>
    tpu.vector_store %arg10[%c16, %c0_13], %38 {strides = array<i32>} : memref<72x512xf32, #tpu.memory_space<vmem>>, vector<8x512xf32>,
    %c1_i32_14 = arith.constant 1 : i32
    %40 = tpu.dynamic_rotate %0 by %c1_i32_14 dim 1 : vector<8x512xf32>, i32 -> vector<8x512xf32>
    %cst_15 = arith.constant 0.000000e+00 : f32
    %41 = vector.shape_cast %13 : vector<1x512xi1> to vector<1x512xi1>
    %42 = vector.broadcast %41 : vector<1x512xi1> to vector<8x512xi1>
    %43 = vector.broadcast %cst_15 : f32 to vector<8x512xf32>
    %44 = arith.select %42, %40, %43 : vector<8x512xi1>, vector<8x512xf32>
    %c24 = arith.constant 24 : index
    %c0_16 = arith.constant 0 : index
    %45 = vector.load %arg10[%c24, %c0_16] : memref<72x512xf32, #tpu.memory_space<vmem>>, vector<8x512xf32>
    tpu.vector_store %arg10[%c24, %c0_16], %44 {strides = array<i32>} : memref<72x512xf32, #tpu.memory_space<vmem>>, vector<8x512xf32>,
    %c32 = arith.constant 32 : index
    %c0_17 = arith.constant 0 : index
    %46 = vector.load %arg10[%c32, %c0_17] : memref<72x512xf32, #tpu.memory_space<vmem>>, vector<8x512xf32>
    tpu.vector_store %arg10[%c32, %c0_17], %0 {strides = array<i32>} : memref<72x512xf32, #tpu.memory_space<vmem>>, vector<8x512xf32>,
    %c511_i32_18 = arith.constant 511 : i32
    %47 = tpu.dynamic_rotate %0 by %c511_i32_18 dim 1 : vector<8x512xf32>, i32 -> vector<8x512xf32>
    %cst_19 = arith.constant 0.000000e+00 : f32
    %48 = vector.shape_cast %15 : vector<1x512xi1> to vector<1x512xi1>
    %49 = vector.broadcast %48 : vector<1x512xi1> to vector<8x512xi1>
    %50 = vector.broadcast %cst_19 : f32 to vector<8x512xf32>
    %51 = arith.select %49, %47, %50 : vector<8x512xi1>, vector<8x512xf32>
    %c40 = arith.constant 40 : index
    %c0_20 = arith.constant 0 : index
    %52 = vector.load %arg10[%c40, %c0_20] : memref<72x512xf32, #tpu.memory_space<vmem>>, vector<8x512xf32>
    tpu.vector_store %arg10[%c40, %c0_20], %51 {strides = array<i32>} : memref<72x512xf32, #tpu.memory_space<vmem>>, vector<8x512xf32>,
    %c1_i32_21 = arith.constant 1 : i32
    %53 = tpu.dynamic_rotate %26 by %c1_i32_21 dim 1 : vector<8x512xf32>, i32 -> vector<8x512xf32>
    %cst_22 = arith.constant 0.000000e+00 : f32
    %54 = vector.shape_cast %13 : vector<1x512xi1> to vector<1x512xi1>
    %55 = vector.broadcast %54 : vector<1x512xi1> to vector<8x512xi1>
    %56 = vector.broadcast %cst_22 : f32 to vector<8x512xf32>
    %57 = arith.select %55, %53, %56 : vector<8x512xi1>, vector<8x512xf32>
    %c48 = arith.constant 48 : index
    %c0_23 = arith.constant 0 : index
    %58 = vector.load %arg10[%c48, %c0_23] : memref<72x512xf32, #tpu.memory_space<vmem>>, vector<8x512xf32>
    tpu.vector_store %arg10[%c48, %c0_23], %57 {strides = array<i32>} : memref<72x512xf32, #tpu.memory_space<vmem>>, vector<8x512xf32>,
    %c56 = arith.constant 56 : index
    %c0_24 = arith.constant 0 : index
    %59 = vector.load %arg10[%c56, %c0_24] : memref<72x512xf32, #tpu.memory_space<vmem>>, vector<8x512xf32>
    tpu.vector_store %arg10[%c56, %c0_24], %26 {strides = array<i32>} : memref<72x512xf32, #tpu.memory_space<vmem>>, vector<8x512xf32>,
    %c511_i32_25 = arith.constant 511 : i32
    %60 = tpu.dynamic_rotate %26 by %c511_i32_25 dim 1 : vector<8x512xf32>, i32 -> vector<8x512xf32>
    %cst_26 = arith.constant 0.000000e+00 : f32
    %61 = vector.shape_cast %15 : vector<1x512xi1> to vector<1x512xi1>
    %62 = vector.broadcast %61 : vector<1x512xi1> to vector<8x512xi1>
    %63 = vector.broadcast %cst_26 : f32 to vector<8x512xf32>
    %64 = arith.select %62, %60, %63 : vector<8x512xi1>, vector<8x512xf32>
    %c64 = arith.constant 64 : index
    %c0_27 = arith.constant 0 : index
    %65 = vector.load %arg10[%c64, %c0_27] : memref<72x512xf32, #tpu.memory_space<vmem>>, vector<8x512xf32>
    tpu.vector_store %arg10[%c64, %c0_27], %64 {strides = array<i32>} : memref<72x512xf32, #tpu.memory_space<vmem>>, vector<8x512xf32>,
    %c0_28 = arith.constant 0 : index
    %c0_29 = arith.constant 0 : index
    %66 = vector.load %arg3[%c0_28, %c0_29] : memref<16x72xbf16, #tpu.memory_space<vmem>>, vector<16x72xbf16>
    %c0_30 = arith.constant 0 : index
    %c0_31 = arith.constant 0 : index
    %67 = vector.load %arg10[%c0_30, %c0_31] : memref<72x512xf32, #tpu.memory_space<vmem>>, vector<72x512xf32>
    %68 = arith.truncf %67 : vector<72x512xf32> to vector<72x512xbf16>
    %cst_32 = arith.constant dense<0.000000e+00> : vector<16x512xf32>
    %69 = tpu.matmul %66, %68, %cst_32 {dimension_numbers = #tpu.dot_dimension_numbers<[1], [0], [0], [1], [0, 0, 1, 1], [], []>} : vector<16x72xbf16>, vector<72x512xbf16>, vector<16x512xf32> -> vector<16x512xf32>
    %c0_33 = arith.constant 0 : index
    %c0_34 = arith.constant 0 : index
    %70 = vector.load %arg4[%c0_33, %c0_34] : memref<16x1xf32, #tpu.memory_space<vmem>>, vector<16x1xf32>
    %71 = vector.broadcast %70 : vector<16x1xf32> to vector<16x512xf32>
    %72 = arith.addf %69, %71 : vector<16x512xf32>
    %cst_35 = arith.constant 0.000000e+00 : f32
    %73 = vector.broadcast %cst_35 : f32 to vector<16x512xf32>
    %74 = arith.maximumf %72, %73 : vector<16x512xf32>
    %c16_i32_36 = arith.constant 16 : i32
    %75 = tpu.dynamic_rotate %74 by %c16_i32_36 dim 1 : vector<16x512xf32>, i32 -> vector<16x512xf32>
    %cst_37 = arith.constant 0.000000e+00 : f32
    %76 = vector.shape_cast %9 : vector<1x512xi1> to vector<1x512xi1>
    %77 = vector.broadcast %76 : vector<1x512xi1> to vector<16x512xi1>
    %78 = vector.broadcast %cst_37 : f32 to vector<16x512xf32>
    %79 = arith.select %77, %75, %78 : vector<16x512xi1>, vector<16x512xf32>
    %c496_i32_38 = arith.constant 496 : i32
    %80 = tpu.dynamic_rotate %74 by %c496_i32_38 dim 1 : vector<16x512xf32>, i32 -> vector<16x512xf32>
    %cst_39 = arith.constant 0.000000e+00 : f32
    %81 = vector.shape_cast %11 : vector<1x512xi1> to vector<1x512xi1>
    %82 = vector.broadcast %81 : vector<1x512xi1> to vector<16x512xi1>
    %83 = vector.broadcast %cst_39 : f32 to vector<16x512xf32>
    %84 = arith.select %82, %80, %83 : vector<16x512xi1>, vector<16x512xf32>
    %c1_i32_40 = arith.constant 1 : i32
    %85 = tpu.dynamic_rotate %79 by %c1_i32_40 dim 1 : vector<16x512xf32>, i32 -> vector<16x512xf32>
    %cst_41 = arith.constant 0.000000e+00 : f32
    %86 = vector.shape_cast %13 : vector<1x512xi1> to vector<1x512xi1>
    %87 = vector.broadcast %86 : vector<1x512xi1> to vector<16x512xi1>
    %88 = vector.broadcast %cst_41 : f32 to vector<16x512xf32>
    %89 = arith.select %87, %85, %88 : vector<16x512xi1>, vector<16x512xf32>
    %c0_42 = arith.constant 0 : index
    %c0_43 = arith.constant 0 : index
    %90 = vector.load %arg11[%c0_42, %c0_43] : memref<144x512xf32, #tpu.memory_space<vmem>>, vector<16x512xf32>
    tpu.vector_store %arg11[%c0_42, %c0_43], %89 {strides = array<i32>} : memref<144x512xf32, #tpu.memory_space<vmem>>, vector<16x512xf32>,
    %c16_44 = arith.constant 16 : index
    %c0_45 = arith.constant 0 : index
    %91 = vector.load %arg11[%c16_44, %c0_45] : memref<144x512xf32, #tpu.memory_space<vmem>>, vector<16x512xf32>
    tpu.vector_store %arg11[%c16_44, %c0_45], %79 {strides = array<i32>} : memref<144x512xf32, #tpu.memory_space<vmem>>, vector<16x512xf32>,
    %c511_i32_46 = arith.constant 511 : i32
    %92 = tpu.dynamic_rotate %79 by %c511_i32_46 dim 1 : vector<16x512xf32>, i32 -> vector<16x512xf32>
    %cst_47 = arith.constant 0.000000e+00 : f32
    %93 = vector.shape_cast %15 : vector<1x512xi1> to vector<1x512xi1>
    %94 = vector.broadcast %93 : vector<1x512xi1> to vector<16x512xi1>
    %95 = vector.broadcast %cst_47 : f32 to vector<16x512xf32>
    %96 = arith.select %94, %92, %95 : vector<16x512xi1>, vector<16x512xf32>
    %c32_48 = arith.constant 32 : index
    %c0_49 = arith.constant 0 : index
    %97 = vector.load %arg11[%c32_48, %c0_49] : memref<144x512xf32, #tpu.memory_space<vmem>>, vector<16x512xf32>
    tpu.vector_store %arg11[%c32_48, %c0_49], %96 {strides = array<i32>} : memref<144x512xf32, #tpu.memory_space<vmem>>, vector<16x512xf32>,
    %c1_i32_50 = arith.constant 1 : i32
    %98 = tpu.dynamic_rotate %74 by %c1_i32_50 dim 1 : vector<16x512xf32>, i32 -> vector<16x512xf32>
    %cst_51 = arith.constant 0.000000e+00 : f32
    %99 = vector.shape_cast %13 : vector<1x512xi1> to vector<1x512xi1>
    %100 = vector.broadcast %99 : vector<1x512xi1> to vector<16x512xi1>
    %101 = vector.broadcast %cst_51 : f32 to vector<16x512xf32>
    %102 = arith.select %100, %98, %101 : vector<16x512xi1>, vector<16x512xf32>
    %c48_52 = arith.constant 48 : index
    %c0_53 = arith.constant 0 : index
    %103 = vector.load %arg11[%c48_52, %c0_53] : memref<144x512xf32, #tpu.memory_space<vmem>>, vector<16x512xf32>
    tpu.vector_store %arg11[%c48_52, %c0_53], %102 {strides = array<i32>} : memref<144x512xf32, #tpu.memory_space<vmem>>, vector<16x512xf32>,
    %c64_54 = arith.constant 64 : index
    %c0_55 = arith.constant 0 : index
    %104 = vector.load %arg11[%c64_54, %c0_55] : memref<144x512xf32, #tpu.memory_space<vmem>>, vector<16x512xf32>
    tpu.vector_store %arg11[%c64_54, %c0_55], %74 {strides = array<i32>} : memref<144x512xf32, #tpu.memory_space<vmem>>, vector<16x512xf32>,
    %c511_i32_56 = arith.constant 511 : i32
    %105 = tpu.dynamic_rotate %74 by %c511_i32_56 dim 1 : vector<16x512xf32>, i32 -> vector<16x512xf32>
    %cst_57 = arith.constant 0.000000e+00 : f32
    %106 = vector.shape_cast %15 : vector<1x512xi1> to vector<1x512xi1>
    %107 = vector.broadcast %106 : vector<1x512xi1> to vector<16x512xi1>
    %108 = vector.broadcast %cst_57 : f32 to vector<16x512xf32>
    %109 = arith.select %107, %105, %108 : vector<16x512xi1>, vector<16x512xf32>
    %c80 = arith.constant 80 : index
    %c0_58 = arith.constant 0 : index
    %110 = vector.load %arg11[%c80, %c0_58] : memref<144x512xf32, #tpu.memory_space<vmem>>, vector<16x512xf32>
    tpu.vector_store %arg11[%c80, %c0_58], %109 {strides = array<i32>} : memref<144x512xf32, #tpu.memory_space<vmem>>, vector<16x512xf32>,
    %c1_i32_59 = arith.constant 1 : i32
    %111 = tpu.dynamic_rotate %84 by %c1_i32_59 dim 1 : vector<16x512xf32>, i32 -> vector<16x512xf32>
    %cst_60 = arith.constant 0.000000e+00 : f32
    %112 = vector.shape_cast %13 : vector<1x512xi1> to vector<1x512xi1>
    %113 = vector.broadcast %112 : vector<1x512xi1> to vector<16x512xi1>
    %114 = vector.broadcast %cst_60 : f32 to vector<16x512xf32>
    %115 = arith.select %113, %111, %114 : vector<16x512xi1>, vector<16x512xf32>
    %c96 = arith.constant 96 : index
    %c0_61 = arith.constant 0 : index
    %116 = vector.load %arg11[%c96, %c0_61] : memref<144x512xf32, #tpu.memory_space<vmem>>, vector<16x512xf32>
    tpu.vector_store %arg11[%c96, %c0_61], %115 {strides = array<i32>} : memref<144x512xf32, #tpu.memory_space<vmem>>, vector<16x512xf32>,
    %c112 = arith.constant 112 : index
    %c0_62 = arith.constant 0 : index
    %117 = vector.load %arg11[%c112, %c0_62] : memref<144x512xf32, #tpu.memory_space<vmem>>, vector<16x512xf32>
    tpu.vector_store %arg11[%c112, %c0_62], %84 {strides = array<i32>} : memref<144x512xf32, #tpu.memory_space<vmem>>, vector<16x512xf32>,
    %c511_i32_63 = arith.constant 511 : i32
    %118 = tpu.dynamic_rotate %84 by %c511_i32_63 dim 1 : vector<16x512xf32>, i32 -> vector<16x512xf32>
    %cst_64 = arith.constant 0.000000e+00 : f32
    %119 = vector.shape_cast %15 : vector<1x512xi1> to vector<1x512xi1>
    %120 = vector.broadcast %119 : vector<1x512xi1> to vector<16x512xi1>
    %121 = vector.broadcast %cst_64 : f32 to vector<16x512xf32>
    %122 = arith.select %120, %118, %121 : vector<16x512xi1>, vector<16x512xf32>
    %c128 = arith.constant 128 : index
    %c0_65 = arith.constant 0 : index
    %123 = vector.load %arg11[%c128, %c0_65] : memref<144x512xf32, #tpu.memory_space<vmem>>, vector<16x512xf32>
    tpu.vector_store %arg11[%c128, %c0_65], %122 {strides = array<i32>} : memref<144x512xf32, #tpu.memory_space<vmem>>, vector<16x512xf32>,
    %c0_66 = arith.constant 0 : index
    %c0_67 = arith.constant 0 : index
    %124 = vector.load %arg5[%c0_66, %c0_67] : memref<16x144xbf16, #tpu.memory_space<vmem>>, vector<16x144xbf16>
    %c0_68 = arith.constant 0 : index
    %c0_69 = arith.constant 0 : index
    %125 = vector.load %arg11[%c0_68, %c0_69] : memref<144x512xf32, #tpu.memory_space<vmem>>, vector<144x512xf32>
    %126 = arith.truncf %125 : vector<144x512xf32> to vector<144x512xbf16>
    %cst_70 = arith.constant dense<0.000000e+00> : vector<16x512xf32>
    %127 = tpu.matmul %124, %126, %cst_70 {dimension_numbers = #tpu.dot_dimension_numbers<[1], [0], [0], [1], [0, 0, 1, 1], [], []>} : vector<16x144xbf16>, vector<144x512xbf16>, vector<16x512xf32> -> vector<16x512xf32>
    %128 = arith.truncf %127 : vector<16x512xf32> to vector<16x512xbf16>
    %cst_71 = arith.constant dense<0.000000e+00> : vector<16x128xf32>
    %129 = tpu.matmul %128, %16, %cst_71 {dimension_numbers = #tpu.dot_dimension_numbers<[1], [0], [0], [1], [0, 0, 1, 1], [], []>} : vector<16x512xbf16>, vector<512x128xbf16>, vector<16x128xf32> -> vector<16x128xf32>
    %c0_72 = arith.constant 0 : index
    %c0_73 = arith.constant 0 : index
    %130 = vector.load %arg6[%c0_72, %c0_73] : memref<16x1xf32, #tpu.memory_space<vmem>>, vector<16x1xf32>
    %131 = vector.broadcast %130 : vector<16x1xf32> to vector<16x128xf32>
    %132 = arith.addf %129, %131 : vector<16x128xf32>
    %133 = arith.truncf %0 : vector<8x512xf32> to vector<8x512xbf16>
    %cst_74 = arith.constant dense<0.000000e+00> : vector<8x128xf32>
    %134 = tpu.matmul %133, %16, %cst_74 {dimension_numbers = #tpu.dot_dimension_numbers<[1], [0], [0], [1], [0, 0, 1, 1], [], []>} : vector<8x512xbf16>, vector<512x128xbf16>, vector<8x128xf32> -> vector<8x128xf32>
    %c0_75 = arith.constant 0 : index
    %c0_76 = arith.constant 0 : index
    %135 = vector.load %arg7[%c0_75, %c0_76] : memref<16x8xbf16, #tpu.memory_space<vmem>>, vector<16x8xbf16>
    %136 = arith.truncf %134 : vector<8x128xf32> to vector<8x128xbf16>
    %cst_77 = arith.constant dense<0.000000e+00> : vector<16x128xf32>
    %137 = tpu.matmul %135, %136, %cst_77 {dimension_numbers = #tpu.dot_dimension_numbers<[1], [0], [0], [1], [0, 0, 1, 1], [], []>} : vector<16x8xbf16>, vector<8x128xbf16>, vector<16x128xf32> -> vector<16x128xf32>
    %c0_78 = arith.constant 0 : index
    %c0_79 = arith.constant 0 : index
    %138 = vector.load %arg8[%c0_78, %c0_79] : memref<16x1xf32, #tpu.memory_space<vmem>>, vector<16x1xf32>
    %139 = vector.broadcast %138 : vector<16x1xf32> to vector<16x128xf32>
    %140 = arith.addf %137, %139 : vector<16x128xf32>
    %141 = arith.addf %132, %140 : vector<16x128xf32>
    %c0_80 = arith.constant 0 : index
    %c0_81 = arith.constant 0 : index
    %142 = vector.load %arg9[%c0_80, %c0_81] : memref<16x128xf32, #tpu.memory_space<vmem>>, vector<16x128xf32>
    tpu.vector_store %arg9[%c0_80, %c0_81], %141 {strides = array<i32>} : memref<16x128xf32, #tpu.memory_space<vmem>>, vector<16x128xf32>,
    return
  }
  func.func @transform_0(%arg0: i32) -> (i32, i32) {
    %c0_i32 = arith.constant 0 : i32
    %c0_i32_0 = arith.constant 0 : i32
    return %c0_i32, %arg0 : i32, i32
  }
  func.func @transform_1(%arg0: i32) -> (i32, i32) {
    %c0_i32 = arith.constant 0 : i32
    %c0_i32_0 = arith.constant 0 : i32
    %c0_i32_1 = arith.constant 0 : i32
    return %c0_i32, %c0_i32_0 : i32, i32
  }
  func.func @transform_2(%arg0: i32) -> (i32, i32) {
    %c0_i32 = arith.constant 0 : i32
    %c0_i32_0 = arith.constant 0 : i32
    %c0_i32_1 = arith.constant 0 : i32
    return %c0_i32, %c0_i32_0 : i32, i32
  }
  func.func @transform_3(%arg0: i32) -> (i32, i32) {
    %c0_i32 = arith.constant 0 : i32
    %c0_i32_0 = arith.constant 0 : i32
    %c0_i32_1 = arith.constant 0 : i32
    return %c0_i32, %c0_i32_0 : i32, i32
  }
  func.func @transform_4(%arg0: i32) -> (i32, i32) {
    %c0_i32 = arith.constant 0 : i32
    %c0_i32_0 = arith.constant 0 : i32
    %c0_i32_1 = arith.constant 0 : i32
    return %c0_i32, %c0_i32_0 : i32, i32
  }
  func.func @transform_5(%arg0: i32) -> (i32, i32) {
    %c0_i32 = arith.constant 0 : i32
    %c0_i32_0 = arith.constant 0 : i32
    %c0_i32_1 = arith.constant 0 : i32
    return %c0_i32, %c0_i32_0 : i32, i32
  }
  func.func @transform_6(%arg0: i32) -> (i32, i32) {
    %c0_i32 = arith.constant 0 : i32
    %c0_i32_0 = arith.constant 0 : i32
    %c0_i32_1 = arith.constant 0 : i32
    return %c0_i32, %c0_i32_0 : i32, i32
  }
  func.func @transform_7(%arg0: i32) -> (i32, i32) {
    %c0_i32 = arith.constant 0 : i32
    %c0_i32_0 = arith.constant 0 : i32
    %c0_i32_1 = arith.constant 0 : i32
    return %c0_i32, %c0_i32_0 : i32, i32
  }
  func.func @transform_8(%arg0: i32) -> (i32, i32) {
    %c0_i32 = arith.constant 0 : i32
    %c0_i32_0 = arith.constant 0 : i32
    return %c0_i32, %arg0 : i32, i32
  }
}

</mosaic_0001>

<llo_original>
// kernel: optimized_dis_block_forward.1
$region0: #{optimized_dis_block_forward.1}
  #allocation0 [shape = 'u32[]', space=smem, size = 0x4, offset = 0x4, fixed_abs, tag = 'smem constant byte address 0x4 - core index']
  #allocation1 [shape = 'u32[144,128]{1,0:T(1,128)}', space=vmem, size = 0x12000, scoped, tag = 'internal scratch']
  #allocation2 [shape = 'f32[72,512]{1,0:T(8,128)}', space=vmem, size = 0x24000, scoped, tag = 'scratch operand']
  #allocation3 [shape = 'f32[144,512]{1,0:T(8,128)}', space=vmem, size = 0x48000, scoped, tag = 'scratch operand']
  %s0 = inlined_call_operand.vmem [shape: f32[8,512], index: 0, kind: input, shape index: {}]
  %s1 = inlined_call_operand.vmem [shape: bf16[512,128], index: 1, kind: input, shape index: {}]
  %s2 = inlined_call_operand.vmem [shape: bf16[16,72], index: 2, kind: input, shape index: {}]
  %s3 = inlined_call_operand.vmem [shape: f32[16,1], index: 3, kind: input, shape index: {}]
  %s4 = inlined_call_operand.vmem [shape: bf16[16,144], index: 4, kind: input, shape index: {}]
  %s5 = inlined_call_operand.vmem [shape: f32[16,1], index: 5, kind: input, shape index: {}]
  %s6 = inlined_call_operand.vmem [shape: bf16[16,8], index: 6, kind: input, shape index: {}]
  %s7 = inlined_call_operand.vmem [shape: f32[16,1], index: 7, kind: input, shape index: {}]
  %s8 = inlined_call_operand.vmem [shape: f32[16,128], index: 8, kind: output, shape index: {}]
  %s9 = sld [smem:[#allocation0]]
  $region42: #{optimized_dis_block_forward.1} parent=0
    _
  %s11 = ssub.s32 1, %s9
  %s12 = scalar_select 0, %s11, %s9
  // Predicated region
  $region2: #{optimized_dis_block_forward.1} parent=0 // pred_check
    _
  $region3: #{optimized_dis_block_forward.1} parent=0 // pred_check_branch
    %14 = sbr.rel (0) target = $region5
  $region4: #{optimized_dis_block_forward.1} parent=0 // pred_region
    _
  $region5: #{optimized_dis_block_forward.1} parent=0 // pred_fallthru
    _
  // Predicated region
  $region6: #{optimized_dis_block_forward.1} parent=0 // pred_check
    _
  $region7: #{optimized_dis_block_forward.1} parent=0 // pred_check_branch
    %16 = sbr.rel (0) target = $region9
  $region8: #{optimized_dis_block_forward.1} parent=0 // pred_region
    _
  $region9: #{optimized_dis_block_forward.1} parent=0 // pred_fallthru
    _
  // Predicated region
  $region10: #{optimized_dis_block_forward.1} parent=0 // pred_check
    _
  $region11: #{optimized_dis_block_forward.1} parent=0 // pred_check_branch
    %18 = sbr.rel (0) target = $region13
  $region12: #{optimized_dis_block_forward.1} parent=0 // pred_region
    _
  $region13: #{optimized_dis_block_forward.1} parent=0 // pred_fallthru
    _
  // Predicated region
  $region14: #{optimized_dis_block_forward.1} parent=0 // pred_check
    _
  $region15: #{optimized_dis_block_forward.1} parent=0 // pred_check_branch
    %20 = sbr.rel (0) target = $region17
  $region16: #{optimized_dis_block_forward.1} parent=0 // pred_region
    _
  $region17: #{optimized_dis_block_forward.1} parent=0 // pred_fallthru
    _
  // Predicated region
  $region18: #{optimized_dis_block_forward.1} parent=0 // pred_check
    _
  $region19: #{optimized_dis_block_forward.1} parent=0 // pred_check_branch
    %22 = sbr.rel (0) target = $region21
  $region20: #{optimized_dis_block_forward.1} parent=0 // pred_region
    _
  $region21: #{optimized_dis_block_forward.1} parent=0 // pred_fallthru
    _
  // Predicated region
  $region22: #{optimized_dis_block_forward.1} parent=0 // pred_check
    _
  $region23: #{optimized_dis_block_forward.1} parent=0 // pred_check_branch
    %24 = sbr.rel (0) target = $region25
  $region24: #{optimized_dis_block_forward.1} parent=0 // pred_region
    _
  $region25: #{optimized_dis_block_forward.1} parent=0 // pred_fallthru
    _
  // Predicated region
  $region26: #{optimized_dis_block_forward.1} parent=0 // pred_check
    _
  $region27: #{optimized_dis_block_forward.1} parent=0 // pred_check_branch
    %26 = sbr.rel (0) target = $region29
  $region28: #{optimized_dis_block_forward.1} parent=0 // pred_region
    _
  $region29: #{optimized_dis_block_forward.1} parent=0 // pred_fallthru
    _
  // Predicated region
  $region30: #{optimized_dis_block_forward.1} parent=0 // pred_check
    _
  $region31: #{optimized_dis_block_forward.1} parent=0 // pred_check_branch
    %28 = sbr.rel (0) target = $region33
  $region32: #{optimized_dis_block_forward.1} parent=0 // pred_region
    _
  $region33: #{optimized_dis_block_forward.1} parent=0 // pred_fallthru
    _
  %v30 = vld [vmem:[%s0] sm:$0xff]
  %v31 = vld [vmem:[%s0 + $0x8] sm:$0xff]
  %v32 = vld [vmem:[%s0 + $0x10] sm:$0xff]
  %v33 = vld [vmem:[%s0 + $0x18] sm:$0xff]
  %v34 = vlaneseq
  %v35 = vand.u32 %v34, 127
  %v36 = vadd.s32 %v35, 128
  %v37 = vadd.s32 %v35, 256
  %v38 = vadd.s32 %v35, 384
  %v39 = vand.u32 %v35, 15
  %v40 = vand.u32 %v36, 15
  %v41 = vand.u32 %v37, 15
  %v42 = vand.u32 %v38, 15
  %v43 = vshra.s32 %v35, 4
  %v44 = vshra.s32 %v36, 4
  %v45 = vshra.s32 %v37, 4
  %v46 = vshra.s32 %v38, 4
  %v47 = vand.u32 %v43, 15
  %v48 = vand.u32 %v44, 15
  %v49 = vand.u32 %v45, 15
  %v50 = vand.u32 %v46, 15
  %vm51 = vcmp.ge.s32.totalorder %v47, 1
  %vm52 = vcmp.ge.s32.totalorder %v48, 1
  %vm53 = vcmp.ge.s32.totalorder %v49, 1
  %vm54 = vcmp.ge.s32.totalorder %v50, 1
  %vm55 = vcmp.le.s32.totalorder %v47, 14
  %vm56 = vcmp.le.s32.totalorder %v48, 14
  %vm57 = vcmp.le.s32.totalorder %v49, 14
  %vm58 = vcmp.le.s32.totalorder %v50, 14
  %vm59 = vcmp.ge.s32.totalorder %v39, 1
  %vm60 = vcmp.ge.s32.totalorder %v40, 1
  %vm61 = vcmp.ge.s32.totalorder %v41, 1
  %vm62 = vcmp.ge.s32.totalorder %v42, 1
  %vm63 = vcmp.le.s32.totalorder %v39, 14
  %vm64 = vcmp.le.s32.totalorder %v40, 14
  %vm65 = vcmp.le.s32.totalorder %v41, 14
  %vm66 = vcmp.le.s32.totalorder %v42, 14
  %v67 = vld [vmem:[%s1] sm:$0xf]
  %v68 = vld [vmem:[%s1 + $0x4] sm:$0xf]
  %v69 = vld [vmem:[%s1 + $0x8] sm:$0xf]
  %v70 = vld [vmem:[%s1 + $0xc] sm:$0xf]
  %v71 = vld [vmem:[%s1 + $0x10] sm:$0xf]
  %v72 = vld [vmem:[%s1 + $0x14] sm:$0xf]
  %v73 = vld [vmem:[%s1 + $0x18] sm:$0xf]
  %v74 = vld [vmem:[%s1 + $0x1c] sm:$0xf]
  %v75 = vld [vmem:[%s1 + $0x20] sm:$0xf]
  %v76 = vld [vmem:[%s1 + $0x24] sm:$0xf]
  %v77 = vld [vmem:[%s1 + $0x28] sm:$0xf]
  %v78 = vld [vmem:[%s1 + $0x2c] sm:$0xf]
  %v79 = vld [vmem:[%s1 + $0x30] sm:$0xf]
  %v80 = vld [vmem:[%s1 + $0x34] sm:$0xf]
  %v81 = vld [vmem:[%s1 + $0x38] sm:$0xf]
  %v82 = vld [vmem:[%s1 + $0x3c] sm:$0xf]
  %v83 = vld [vmem:[%s1 + $0x40] sm:$0xf]
  %v84 = vld [vmem:[%s1 + $0x44] sm:$0xf]
  %v85 = vld [vmem:[%s1 + $0x48] sm:$0xf]
  %v86 = vld [vmem:[%s1 + $0x4c] sm:$0xf]
  %v87 = vld [vmem:[%s1 + $0x50] sm:$0xf]
  %v88 = vld [vmem:[%s1 + $0x54] sm:$0xf]
  %v89 = vld [vmem:[%s1 + $0x58] sm:$0xf]
  %v90 = vld [vmem:[%s1 + $0x5c] sm:$0xf]
  %v91 = vld [vmem:[%s1 + $0x60] sm:$0xf]
  %v92 = vld [vmem:[%s1 + $0x64] sm:$0xf]
  %v93 = vld [vmem:[%s1 + $0x68] sm:$0xf]
  %v94 = vld [vmem:[%s1 + $0x6c] sm:$0xf]
  %v95 = vld [vmem:[%s1 + $0x70] sm:$0xf]
  %v96 = vld [vmem:[%s1 + $0x74] sm:$0xf]
  %v97 = vld [vmem:[%s1 + $0x78] sm:$0xf]
  %v98 = vld [vmem:[%s1 + $0x7c] sm:$0xf]
  %v99 = vld [vmem:[%s1 + $0x80] sm:$0xf]
  %v100 = vld [vmem:[%s1 + $0x84] sm:$0xf]
  %v101 = vld [vmem:[%s1 + $0x88] sm:$0xf]
  %v102 = vld [vmem:[%s1 + $0x8c] sm:$0xf]
  %v103 = vld [vmem:[%s1 + $0x90] sm:$0xf]
  %v104 = vld [vmem:[%s1 + $0x94] sm:$0xf]
  %v105 = vld [vmem:[%s1 + $0x98] sm:$0xf]
  %v106 = vld [vmem:[%s1 + $0x9c] sm:$0xf]
  %v107 = vld [vmem:[%s1 + $0xa0] sm:$0xf]
  %v108 = vld [vmem:[%s1 + $0xa4] sm:$0xf]
  %v109 = vld [vmem:[%s1 + $0xa8] sm:$0xf]
  %v110 = vld [vmem:[%s1 + $0xac] sm:$0xf]
  %v111 = vld [vmem:[%s1 + $0xb0] sm:$0xf]
  %v112 = vld [vmem:[%s1 + $0xb4] sm:$0xf]
  %v113 = vld [vmem:[%s1 + $0xb8] sm:$0xf]
  %v114 = vld [vmem:[%s1 + $0xbc] sm:$0xf]
  %v115 = vld [vmem:[%s1 + $0xc0] sm:$0xf]
  %v116 = vld [vmem:[%s1 + $0xc4] sm:$0xf]
  %v117 = vld [vmem:[%s1 + $0xc8] sm:$0xf]
  %v118 = vld [vmem:[%s1 + $0xcc] sm:$0xf]
  %v119 = vld [vmem:[%s1 + $0xd0] sm:$0xf]
  %v120 = vld [vmem:[%s1 + $0xd4] sm:$0xf]
  %v121 = vld [vmem:[%s1 + $0xd8] sm:$0xf]
  %v122 = vld [vmem:[%s1 + $0xdc] sm:$0xf]
  %v123 = vld [vmem:[%s1 + $0xe0] sm:$0xf]
  %v124 = vld [vmem:[%s1 + $0xe4] sm:$0xf]
  %v125 = vld [vmem:[%s1 + $0xe8] sm:$0xf]
  %v126 = vld [vmem:[%s1 + $0xec] sm:$0xf]
  %v127 = vld [vmem:[%s1 + $0xf0] sm:$0xf]
  %v128 = vld [vmem:[%s1 + $0xf4] sm:$0xf]
  %v129 = vld [vmem:[%s1 + $0xf8] sm:$0xf]
  %v130 = vld [vmem:[%s1 + $0xfc] sm:$0xf]
  %131 = vrot.lane.b32.xlu0 %v30, 16
  %v132 = vpop.permute.xlu0 %131
  %133 = vrot.lane.b32.xlu0 %v31, 16
  %v134 = vpop.permute.xlu0 %133
  %135 = vrot.lane.b32.xlu0 %v32, 16
  %v136 = vpop.permute.xlu0 %135
  %137 = vrot.lane.b32.xlu0 %v33, 16
  %v138 = vpop.permute.xlu0 %137
  %vm139 = vcmp.lt.s32.totalorder %v35, 16
  %v140 = vsel %vm139, %v136, %v138
  %v141 = vsel %vm139, %v134, %v136
  %v142 = vsel %vm139, %v132, %v134
  %v143 = vsel %vm139, %v138, %v132
  %v144 = vsel %vm51, 1, 0
  %v145 = vsel %vm52, 1, 0
  %v146 = vsel %vm53, 1, 0
  %v147 = vsel %vm54, 1, 0
  %vm148 = vcmp.eq.s32.totalorder %v144, 1
  %vm149 = vcmp.eq.s32.totalorder %v145, 1
  %vm150 = vcmp.eq.s32.totalorder %v146, 1
  %vm151 = vcmp.eq.s32.totalorder %v147, 1
  %v152 = vsel %vm148, %v143, 0.0
  %v153 = vsel %vm149, %v142, 0.0
  %v154 = vsel %vm150, %v141, 0.0
  %v155 = vsel %vm151, %v140, 0.0
  %156 = vrot.lane.b32.xlu0 %v30, 112
  %v157 = vpop.permute.xlu0 %156
  %158 = vrot.lane.b32.xlu0 %v31, 112
  %v159 = vpop.permute.xlu0 %158
  %160 = vrot.lane.b32.xlu0 %v32, 112
  %v161 = vpop.permute.xlu0 %160
  %162 = vrot.lane.b32.xlu0 %v33, 112
  %v163 = vpop.permute.xlu0 %162
  %vm164 = vcmp.lt.s32.totalorder %v35, 112
  %v165 = vsel %vm164, %v161, %v163
  %v166 = vsel %vm164, %v159, %v161
  %v167 = vsel %vm164, %v157, %v159
  %v168 = vsel %vm164, %v163, %v157
  %v169 = vsel %vm55, 1, 0
  %v170 = vsel %vm56, 1, 0
  %v171 = vsel %vm57, 1, 0
  %v172 = vsel %vm58, 1, 0
  %vm173 = vcmp.eq.s32.totalorder %v169, 1
  %vm174 = vcmp.eq.s32.totalorder %v170, 1
  %vm175 = vcmp.eq.s32.totalorder %v171, 1
  %vm176 = vcmp.eq.s32.totalorder %v172, 1
  %v177 = vsel %vm173, %v167, 0.0
  %v178 = vsel %vm174, %v166, 0.0
  %v179 = vsel %vm175, %v165, 0.0
  %v180 = vsel %vm176, %v168, 0.0
  %181 = vrot.lane.b32.xlu0 %v152, 1
  %v182 = vpop.permute.xlu0 %181
  %183 = vrot.lane.b32.xlu0 %v153, 1
  %v184 = vpop.permute.xlu0 %183
  %185 = vrot.lane.b32.xlu0 %v154, 1
  %v186 = vpop.permute.xlu0 %185
  %187 = vrot.lane.b32.xlu0 %v155, 1
  %v188 = vpop.permute.xlu0 %187
  %vm189 = vcmp.lt.s32.totalorder %v35, 1
  %v190 = vsel %vm189, %v186, %v188
  %v191 = vsel %vm189, %v184, %v186
  %v192 = vsel %vm189, %v182, %v184
  %v193 = vsel %vm189, %v188, %v182
  %v194 = vsel %vm59, 1, 0
  %v195 = vsel %vm60, 1, 0
  %v196 = vsel %vm61, 1, 0
  %v197 = vsel %vm62, 1, 0
  %vm198 = vcmp.eq.s32.totalorder %v194, 1
  %vm199 = vcmp.eq.s32.totalorder %v195, 1
  %vm200 = vcmp.eq.s32.totalorder %v196, 1
  %vm201 = vcmp.eq.s32.totalorder %v197, 1
  %v202 = vsel %vm198, %v193, 0.0
  %v203 = vsel %vm199, %v192, 0.0
  %v204 = vsel %vm200, %v191, 0.0
  %v205 = vsel %vm201, %v190, 0.0
  %206 = vst [vmem:[#allocation2] sm:$0xff] %v202
  %207 = vst [vmem:[#allocation2 + $0x8] sm:$0xff] %v203
  %208 = vst [vmem:[#allocation2 + $0x10] sm:$0xff] %v204
  %209 = vst [vmem:[#allocation2 + $0x18] sm:$0xff] %v205
  %210 = vst [vmem:[#allocation2 + $0x20] sm:$0xff] %v152
  %211 = vst [vmem:[#allocation2 + $0x28] sm:$0xff] %v153
  %212 = vst [vmem:[#allocation2 + $0x30] sm:$0xff] %v154
  %213 = vst [vmem:[#allocation2 + $0x38] sm:$0xff] %v155
  %214 = vrot.lane.b32.xlu0 %v152, 127
  %v215 = vpop.permute.xlu0 %214
  %216 = vrot.lane.b32.xlu0 %v153, 127
  %v217 = vpop.permute.xlu0 %216
  %218 = vrot.lane.b32.xlu0 %v154, 127
  %v219 = vpop.permute.xlu0 %218
  %220 = vrot.lane.b32.xlu0 %v155, 127
  %v221 = vpop.permute.xlu0 %220
  %vm222 = vcmp.lt.s32.totalorder %v35, 127
  %v223 = vsel %vm222, %v219, %v221
  %v224 = vsel %vm222, %v217, %v219
  %v225 = vsel %vm222, %v215, %v217
  %v226 = vsel %vm222, %v221, %v215
  %v227 = vsel %vm63, 1, 0
  %v228 = vsel %vm64, 1, 0
  %v229 = vsel %vm65, 1, 0
  %v230 = vsel %vm66, 1, 0
  %vm231 = vcmp.eq.s32.totalorder %v227, 1
  %vm232 = vcmp.eq.s32.totalorder %v228, 1
  %vm233 = vcmp.eq.s32.totalorder %v229, 1
  %vm234 = vcmp.eq.s32.totalorder %v230, 1
  %v235 = vsel %vm231, %v225, 0.0
  %v236 = vsel %vm232, %v224, 0.0
  %v237 = vsel %vm233, %v223, 0.0
  %v238 = vsel %vm234, %v226, 0.0
  %239 = vst [vmem:[#allocation2 + $0x40] sm:$0xff] %v235
  %240 = vst [vmem:[#allocation2 + $0x48] sm:$0xff] %v236
  %241 = vst [vmem:[#allocation2 + $0x50] sm:$0xff] %v237
  %242 = vst [vmem:[#allocation2 + $0x58] sm:$0xff] %v238
  %243 = vrot.lane.b32.xlu0 %v30, 1
  %v244 = vpop.permute.xlu0 %243
  %245 = vrot.lane.b32.xlu0 %v31, 1
  %v246 = vpop.permute.xlu0 %245
  %247 = vrot.lane.b32.xlu0 %v32, 1
  %v248 = vpop.permute.xlu0 %247
  %249 = vrot.lane.b32.xlu0 %v33, 1
  %v250 = vpop.permute.xlu0 %249
  %v251 = vsel %vm189, %v248, %v250
  %v252 = vsel %vm189, %v246, %v248
  %v253 = vsel %vm189, %v244, %v246
  %v254 = vsel %vm189, %v250, %v244
  %v255 = vsel %vm198, %v254, 0.0
  %v256 = vsel %vm199, %v253, 0.0
  %v257 = vsel %vm200, %v252, 0.0
  %v258 = vsel %vm201, %v251, 0.0
  %259 = vst [vmem:[#allocation2 + $0x60] sm:$0xff] %v255
  %260 = vst [vmem:[#allocation2 + $0x68] sm:$0xff] %v256
  %261 = vst [vmem:[#allocation2 + $0x70] sm:$0xff] %v257
  %262 = vst [vmem:[#allocation2 + $0x78] sm:$0xff] %v258
  %263 = vst [vmem:[#allocation2 + $0x80] sm:$0xff] %v30
  %264 = vst [vmem:[#allocation2 + $0x88] sm:$0xff] %v31
  %265 = vst [vmem:[#allocation2 + $0x90] sm:$0xff] %v32
  %266 = vst [vmem:[#allocation2 + $0x98] sm:$0xff] %v33
  %267 = vrot.lane.b32.xlu0 %v30, 127
  %v268 = vpop.permute.xlu0 %267
  %269 = vrot.lane.b32.xlu0 %v31, 127
  %v270 = vpop.permute.xlu0 %269
  %271 = vrot.lane.b32.xlu0 %v32, 127
  %v272 = vpop.permute.xlu0 %271
  %273 = vrot.lane.b32.xlu0 %v33, 127
  %v274 = vpop.permute.xlu0 %273
  %v275 = vsel %vm222, %v272, %v274
  %v276 = vsel %vm222, %v270, %v272
  %v277 = vsel %vm222, %v268, %v270
  %v278 = vsel %vm222, %v274, %v268
  %v279 = vsel %vm231, %v277, 0.0
  %v280 = vsel %vm232, %v276, 0.0
  %v281 = vsel %vm233, %v275, 0.0
  %v282 = vsel %vm234, %v278, 0.0
  %283 = vst [vmem:[#allocation2 + $0xa0] sm:$0xff] %v279
  %284 = vst [vmem:[#allocation2 + $0xa8] sm:$0xff] %v280
  %285 = vst [vmem:[#allocation2 + $0xb0] sm:$0xff] %v281
  %286 = vst [vmem:[#allocation2 + $0xb8] sm:$0xff] %v282
  %287 = vrot.lane.b32.xlu0 %v177, 1
  %v288 = vpop.permute.xlu0 %287
  %289 = vrot.lane.b32.xlu0 %v178, 1
  %v290 = vpop.permute.xlu0 %289
  %291 = vrot.lane.b32.xlu0 %v179, 1
  %v292 = vpop.permute.xlu0 %291
  %293 = vrot.lane.b32.xlu0 %v180, 1
  %v294 = vpop.permute.xlu0 %293
  %v295 = vsel %vm189, %v292, %v294
  %v296 = vsel %vm189, %v290, %v292
  %v297 = vsel %vm189, %v288, %v290
  %v298 = vsel %vm189, %v294, %v288
  %v299 = vsel %vm198, %v298, 0.0
  %v300 = vsel %vm199, %v297, 0.0
  %v301 = vsel %vm200, %v296, 0.0
  %v302 = vsel %vm201, %v295, 0.0
  %303 = vst [vmem:[#allocation2 + $0xc0] sm:$0xff] %v299
  %304 = vst [vmem:[#allocation2 + $0xc8] sm:$0xff] %v300
  %305 = vst [vmem:[#allocation2 + $0xd0] sm:$0xff] %v301
  %306 = vst [vmem:[#allocation2 + $0xd8] sm:$0xff] %v302
  %307 = vst [vmem:[#allocation2 + $0xe0] sm:$0xff] %v177
  %308 = vst [vmem:[#allocation2 + $0xe8] sm:$0xff] %v178
  %309 = vst [vmem:[#allocation2 + $0xf0] sm:$0xff] %v179
  %310 = vst [vmem:[#allocation2 + $0xf8] sm:$0xff] %v180
  %311 = vrot.lane.b32.xlu0 %v177, 127
  %v312 = vpop.permute.xlu0 %311
  %313 = vrot.lane.b32.xlu0 %v178, 127
  %v314 = vpop.permute.xlu0 %313
  %315 = vrot.lane.b32.xlu0 %v179, 127
  %v316 = vpop.permute.xlu0 %315
  %317 = vrot.lane.b32.xlu0 %v180, 127
  %v318 = vpop.permute.xlu0 %317
  %v319 = vsel %vm222, %v316, %v318
  %v320 = vsel %vm222, %v314, %v316
  %v321 = vsel %vm222, %v312, %v314
  %v322 = vsel %vm222, %v318, %v312
  %v323 = vsel %vm231, %v321, 0.0
  %v324 = vsel %vm232, %v320, 0.0
  %v325 = vsel %vm233, %v319, 0.0
  %v326 = vsel %vm234, %v322, 0.0
  %327 = vst [vmem:[#allocation2 + $0x100] sm:$0xff] %v323
  %328 = vst [vmem:[#allocation2 + $0x108] sm:$0xff] %v324
  %329 = vst [vmem:[#allocation2 + $0x110] sm:$0xff] %v325
  %330 = vst [vmem:[#allocation2 + $0x118] sm:$0xff] %v326
  %v331 = vld [vmem:[%s2] sm:$0xf]
  %v332 = vld [vmem:[%s2 + $0x4] sm:$0xf]
  %v333 = vld [vmem:[#allocation2] sm:$0xff]
  %v334 = vld [vmem:[#allocation2 + $0x8] sm:$0xff]
  %v335 = vld [vmem:[#allocation2 + $0x10] sm:$0xff]
  %v336 = vld [vmem:[#allocation2 + $0x18] sm:$0xff]
  %v337 = vld [vmem:[#allocation2 + $0x20] sm:$0xff]
  %v338 = vld [vmem:[#allocation2 + $0x28] sm:$0xff]
  %v339 = vld [vmem:[#allocation2 + $0x30] sm:$0xff]
  %v340 = vld [vmem:[#allocation2 + $0x38] sm:$0xff]
  %v341 = vld [vmem:[#allocation2 + $0x40] sm:$0xff]
  %v342 = vld [vmem:[#allocation2 + $0x48] sm:$0xff]
  %v343 = vld [vmem:[#allocation2 + $0x50] sm:$0xff]
  %v344 = vld [vmem:[#allocation2 + $0x58] sm:$0xff]
  %v345 = vld [vmem:[#allocation2 + $0x60] sm:$0xff]
  %v346 = vld [vmem:[#allocation2 + $0x68] sm:$0xff]
  %v347 = vld [vmem:[#allocation2 + $0x70] sm:$0xff]
  %v348 = vld [vmem:[#allocation2 + $0x78] sm:$0xff]
  %v349 = vld [vmem:[#allocation2 + $0x80] sm:$0xff]
  %v350 = vld [vmem:[#allocation2 + $0x88] sm:$0xff]
  %v351 = vld [vmem:[#allocation2 + $0x90] sm:$0xff]
  %v352 = vld [vmem:[#allocation2 + $0x98] sm:$0xff]
  %v353 = vld [vmem:[#allocation2 + $0xa0] sm:$0xff]
  %v354 = vld [vmem:[#allocation2 + $0xa8] sm:$0xff]
  %v355 = vld [vmem:[#allocation2 + $0xb0] sm:$0xff]
  %v356 = vld [vmem:[#allocation2 + $0xb8] sm:$0xff]
  %v357 = vld [vmem:[#allocation2 + $0xc0] sm:$0xff]
  %v358 = vld [vmem:[#allocation2 + $0xc8] sm:$0xff]
  %v359 = vld [vmem:[#allocation2 + $0xd0] sm:$0xff]
  %v360 = vld [vmem:[#allocation2 + $0xd8] sm:$0xff]
  %v361 = vld [vmem:[#allocation2 + $0xe0] sm:$0xff]
  %v362 = vld [vmem:[#allocation2 + $0xe8] sm:$0xff]
  %v363 = vld [vmem:[#allocation2 + $0xf0] sm:$0xff]
  %v364 = vld [vmem:[#allocation2 + $0xf8] sm:$0xff]
  %v365 = vld [vmem:[#allocation2 + $0x100] sm:$0xff]
  %v366 = vld [vmem:[#allocation2 + $0x108] sm:$0xff]
  %v367 = vld [vmem:[#allocation2 + $0x110] sm:$0xff]
  %v368 = vld [vmem:[#allocation2 + $0x118] sm:$0xff]
  %v369 = vpack.c.bf16 %v337, %v333
  %v370 = vpack.c.bf16 %v338, %v334
  %v371 = vpack.c.bf16 %v339, %v335
  %v372 = vpack.c.bf16 %v340, %v336
  %v373 = vpack.c.bf16 %v345, %v341
  %v374 = vpack.c.bf16 %v346, %v342
  %v375 = vpack.c.bf16 %v347, %v343
  %v376 = vpack.c.bf16 %v348, %v344
  %v377 = vpack.c.bf16 %v353, %v349
  %v378 = vpack.c.bf16 %v354, %v350
  %v379 = vpack.c.bf16 %v355, %v351
  %v380 = vpack.c.bf16 %v356, %v352
  %v381 = vpack.c.bf16 %v361, %v357
  %v382 = vpack.c.bf16 %v362, %v358
  %v383 = vpack.c.bf16 %v363, %v359
  %v384 = vpack.c.bf16 %v364, %v360
  %v385 = vpack.c.bf16 %v365, %v365
  %v386 = vpack.c.bf16 %v366, %v366
  %v387 = vpack.c.bf16 %v367, %v367
  %v388 = vpack.c.bf16 %v368, %v368
  %v389 = vld [vmem:[%s3] sm:$0xff]
  %v390 = vld [vmem:[%s3 + $0x8] sm:$0xff]
  %392 = vset.pattern.permute.xlu0 0
  %393 = vperm.xlu0 %392, %v389
  %v394 = vpop.permute.xlu0 %393
  %397 = vset.pattern.permute.xlu0 0
  %398 = vperm.xlu0 %397, %v390
  %v399 = vpop.permute.xlu0 %398
  %v403 = vunpack.c.l.b16 %v331
  %v404 = vunpack.c.l.b16 %v332
  %v405 = vpack.c.b16 %v404, %v403
  %vm406 = vcmask 588800
  %v408 = vsel %vm406, %v405, 0
  %vm410 = vcmask 1043456
  %v412 = vsel %vm410, %v385, 0
  %v415 = vsel %vm410, %v386, 0
  %v418 = vsel %vm410, %v387, 0
  %v421 = vsel %vm410, %v388, 0
  %423 = vmatprep.subr.bf16.mxu0 %v370
  %424 = vmatpush1.bf16.msra.mxu0 %v369
  %425 = vmatprep.subr.bf16.mxu0 %v374
  %426 = vmatpush1.bf16.msra.mxu0 %v373
  %427 = vmatprep.subr.bf16.mxu0 %v378
  %428 = vmatpush1.bf16.msra.mxu0 %v377
  %429 = vmatprep.subr.bf16.mxu0 %v382
  %430 = vmatpush1.bf16.msra.mxu0 %v381
  %431 = vmatprep.subr.bf16.mxu0 %v415
  %432 = vmatpush1.bf16.msra.mxu0 %v412
  %433 = vmatprep.subr.bf16.mxu0 0
  %434 = vmatpush1.bf16.msra.mxu0 0
  %435 = vmatprep.subr.bf16.mxu0 0
  %436 = vmatpush1.bf16.msra.mxu0 0
  %437 = vmatprep.subr.bf16.mxu0 0
  %438 = vmatpush1.bf16.msra.mxu0 0
  %439 = vmatprep.subr.bf16.mxu0 0
  %440 = vmatpush1.bf16.msra.mxu0 0
  %441 = vmatprep.subr.bf16.mxu0 0
  %442 = vmatpush1.bf16.msra.mxu0 0
  %443 = vmatprep.subr.bf16.mxu0 0
  %444 = vmatpush1.bf16.msra.mxu0 0
  %445 = vmatprep.subr.bf16.mxu0 0
  %446 = vmatpush1.bf16.msra.mxu0 0
  %447 = vmatprep.subr.bf16.mxu0 0
  %448 = vmatpush1.bf16.msra.mxu0 0
  %449 = vmatprep.subr.bf16.mxu0 0
  %450 = vmatpush1.bf16.msra.mxu0 0
  %451 = vmatprep.subr.bf16.mxu0 0
  %452 = vmatpush1.bf16.msra.mxu0 0
  %453 = vmatprep.subr.bf16.mxu0 0
  %454 = vmatpush1.bf16.msra.mxu0 0
  %455 = vmatprep.mubr.bf16.mxu0 0
  %456 = vmatmul.mubr.bf16.gmra.mrb[0].mxu0 %v408
  %v457 = vpop.f32.mrb[0].mxu0
  %v458 = vadd.f32 %v394, %v457
  %v459 = vpop.f32.mrb[0].mxu0
  %v460 = vadd.f32 %v394, %v459
  %v461 = vpop.f32.mrb[0].mxu0
  %v462 = vadd.f32 %v399, %v461
  %v463 = vpop.f32.mrb[0].mxu0
  %v464 = vadd.f32 %v399, %v463
  %465 = vdwg.mxu0
  %466 = vmatprep.subr.bf16.mxu0 %v372
  %467 = vmatpush1.bf16.msra.mxu0 %v371
  %468 = vmatprep.subr.bf16.mxu0 %v376
  %469 = vmatpush1.bf16.msra.mxu0 %v375
  %470 = vmatprep.subr.bf16.mxu0 %v380
  %471 = vmatpush1.bf16.msra.mxu0 %v379
  %472 = vmatprep.subr.bf16.mxu0 %v384
  %473 = vmatpush1.bf16.msra.mxu0 %v383
  %474 = vmatprep.subr.bf16.mxu0 %v421
  %475 = vmatpush1.bf16.msra.mxu0 %v418
  %476 = vmatprep.subr.bf16.mxu0 0
  %477 = vmatpush1.bf16.msra.mxu0 0
  %478 = vmatprep.subr.bf16.mxu0 0
  %479 = vmatpush1.bf16.msra.mxu0 0
  %480 = vmatprep.subr.bf16.mxu0 0
  %481 = vmatpush1.bf16.msra.mxu0 0
  %482 = vmatprep.subr.bf16.mxu0 0
  %483 = vmatpush1.bf16.msra.mxu0 0
  %484 = vmatprep.subr.bf16.mxu0 0
  %485 = vmatpush1.bf16.msra.mxu0 0
  %486 = vmatprep.subr.bf16.mxu0 0
  %487 = vmatpush1.bf16.msra.mxu0 0
  %488 = vmatprep.subr.bf16.mxu0 0
  %489 = vmatpush1.bf16.msra.mxu0 0
  %490 = vmatprep.subr.bf16.mxu0 0
  %491 = vmatpush1.bf16.msra.mxu0 0
  %492 = vmatprep.subr.bf16.mxu0 0
  %493 = vmatpush1.bf16.msra.mxu0 0
  %494 = vmatprep.subr.bf16.mxu0 0
  %495 = vmatpush1.bf16.msra.mxu0 0
  %496 = vmatprep.subr.bf16.mxu0 0
  %497 = vmatpush1.bf16.msra.mxu0 0
  %498 = vmatprep.mubr.bf16.mxu0 0
  %499 = vmatmul.mubr.bf16.gmra.mrb[0].mxu0 %v408
  %v500 = vpop.f32.mrb[0].mxu0
  %v501 = vadd.f32 %v394, %v500
  %v502 = vpop.f32.mrb[0].mxu0
  %v503 = vadd.f32 %v394, %v502
  %v504 = vpop.f32.mrb[0].mxu0
  %v505 = vadd.f32 %v399, %v504
  %v506 = vpop.f32.mrb[0].mxu0
  %v507 = vadd.f32 %v399, %v506
  %508 = vdwg.mxu0
  %v509 = vmax.f32 %v458, 0.0
  %v510 = vmax.f32 %v460, 0.0
  %v511 = vmax.f32 %v501, 0.0
  %v512 = vmax.f32 %v503, 0.0
  %v513 = vmax.f32 %v462, 0.0
  %v514 = vmax.f32 %v464, 0.0
  %v515 = vmax.f32 %v505, 0.0
  %v516 = vmax.f32 %v507, 0.0
  %517 = vrot.lane.b32.xlu0 %v509, 16
  %v518 = vpop.permute.xlu0 %517
  %519 = vrot.lane.b32.xlu0 %v513, 16
  %v520 = vpop.permute.xlu0 %519
  %521 = vrot.lane.b32.xlu0 %v510, 16
  %v522 = vpop.permute.xlu0 %521
  %523 = vrot.lane.b32.xlu0 %v514, 16
  %v524 = vpop.permute.xlu0 %523
  %525 = vrot.lane.b32.xlu0 %v511, 16
  %v526 = vpop.permute.xlu0 %525
  %527 = vrot.lane.b32.xlu0 %v515, 16
  %v528 = vpop.permute.xlu0 %527
  %529 = vrot.lane.b32.xlu0 %v512, 16
  %v530 = vpop.permute.xlu0 %529
  %531 = vrot.lane.b32.xlu0 %v516, 16
  %v532 = vpop.permute.xlu0 %531
  %v533 = vsel %vm139, %v526, %v530
  %v534 = vsel %vm139, %v528, %v532
  %v535 = vsel %vm139, %v522, %v526
  %v536 = vsel %vm139, %v524, %v528
  %v537 = vsel %vm139, %v518, %v522
  %v538 = vsel %vm139, %v520, %v524
  %v539 = vsel %vm139, %v530, %v518
  %v540 = vsel %vm139, %v532, %v520
  %v541 = vsel %vm148, %v539, 0.0
  %v542 = vsel %vm149, %v537, 0.0
  %v543 = vsel %vm150, %v535, 0.0
  %v544 = vsel %vm151, %v533, 0.0
  %v545 = vsel %vm148, %v540, 0.0
  %v546 = vsel %vm149, %v538, 0.0
  %v547 = vsel %vm150, %v536, 0.0
  %v548 = vsel %vm151, %v534, 0.0
  %549 = vrot.lane.b32.xlu0 %v509, 112
  %v550 = vpop.permute.xlu0 %549
  %551 = vrot.lane.b32.xlu0 %v513, 112
  %v552 = vpop.permute.xlu0 %551
  %553 = vrot.lane.b32.xlu0 %v510, 112
  %v554 = vpop.permute.xlu0 %553
  %555 = vrot.lane.b32.xlu0 %v514, 112
  %v556 = vpop.permute.xlu0 %555
  %557 = vrot.lane.b32.xlu0 %v511, 112
  %v558 = vpop.permute.xlu0 %557
  %559 = vrot.lane.b32.xlu0 %v515, 112
  %v560 = vpop.permute.xlu0 %559
  %561 = vrot.lane.b32.xlu0 %v512, 112
  %v562 = vpop.permute.xlu0 %561
  %563 = vrot.lane.b32.xlu0 %v516, 112
  %v564 = vpop.permute.xlu0 %563
  %v565 = vsel %vm164, %v558, %v562
  %v566 = vsel %vm164, %v560, %v564
  %v567 = vsel %vm164, %v554, %v558
  %v568 = vsel %vm164, %v556, %v560
  %v569 = vsel %vm164, %v550, %v554
  %v570 = vsel %vm164, %v552, %v556
  %v571 = vsel %vm164, %v562, %v550
  %v572 = vsel %vm164, %v564, %v552
  %v573 = vsel %vm173, %v569, 0.0
  %v574 = vsel %vm174, %v567, 0.0
  %v575 = vsel %vm175, %v565, 0.0
  %v576 = vsel %vm176, %v571, 0.0
  %v577 = vsel %vm173, %v570, 0.0
  %v578 = vsel %vm174, %v568, 0.0
  %v579 = vsel %vm175, %v566, 0.0
  %v580 = vsel %vm176, %v572, 0.0
  %581 = vrot.lane.b32.xlu0 %v541, 1
  %v582 = vpop.permute.xlu0 %581
  %583 = vrot.lane.b32.xlu0 %v545, 1
  %v584 = vpop.permute.xlu0 %583
  %585 = vrot.lane.b32.xlu0 %v542, 1
  %v586 = vpop.permute.xlu0 %585
  %587 = vrot.lane.b32.xlu0 %v546, 1
  %v588 = vpop.permute.xlu0 %587
  %589 = vrot.lane.b32.xlu0 %v543, 1
  %v590 = vpop.permute.xlu0 %589
  %591 = vrot.lane.b32.xlu0 %v547, 1
  %v592 = vpop.permute.xlu0 %591
  %593 = vrot.lane.b32.xlu0 %v544, 1
  %v594 = vpop.permute.xlu0 %593
  %595 = vrot.lane.b32.xlu0 %v548, 1
  %v596 = vpop.permute.xlu0 %595
  %v597 = vsel %vm189, %v590, %v594
  %v598 = vsel %vm189, %v592, %v596
  %v599 = vsel %vm189, %v586, %v590
  %v600 = vsel %vm189, %v588, %v592
  %v601 = vsel %vm189, %v582, %v586
  %v602 = vsel %vm189, %v584, %v588
  %v603 = vsel %vm189, %v594, %v582
  %v604 = vsel %vm189, %v596, %v584
  %v605 = vsel %vm198, %v603, 0.0
  %v606 = vsel %vm199, %v601, 0.0
  %v607 = vsel %vm200, %v599, 0.0
  %v608 = vsel %vm201, %v597, 0.0
  %v609 = vsel %vm198, %v604, 0.0
  %v610 = vsel %vm199, %v602, 0.0
  %v611 = vsel %vm200, %v600, 0.0
  %v612 = vsel %vm201, %v598, 0.0
  %613 = vst [vmem:[#allocation3] sm:$0xff] %v605
  %614 = vst [vmem:[#allocation3 + $0x8] sm:$0xff] %v606
  %615 = vst [vmem:[#allocation3 + $0x10] sm:$0xff] %v607
  %616 = vst [vmem:[#allocation3 + $0x18] sm:$0xff] %v608
  %617 = vst [vmem:[#allocation3 + $0x20] sm:$0xff] %v609
  %618 = vst [vmem:[#allocation3 + $0x28] sm:$0xff] %v610
  %619 = vst [vmem:[#allocation3 + $0x30] sm:$0xff] %v611
  %620 = vst [vmem:[#allocation3 + $0x38] sm:$0xff] %v612
  %621 = vst [vmem:[#allocation3 + $0x40] sm:$0xff] %v541
  %622 = vst [vmem:[#allocation3 + $0x48] sm:$0xff] %v542
  %623 = vst [vmem:[#allocation3 + $0x50] sm:$0xff] %v543
  %624 = vst [vmem:[#allocation3 + $0x58] sm:$0xff] %v544
  %625 = vst [vmem:[#allocation3 + $0x60] sm:$0xff] %v545
  %626 = vst [vmem:[#allocation3 + $0x68] sm:$0xff] %v546
  %627 = vst [vmem:[#allocation3 + $0x70] sm:$0xff] %v547
  %628 = vst [vmem:[#allocation3 + $0x78] sm:$0xff] %v548
  %629 = vrot.lane.b32.xlu0 %v541, 127
  %v630 = vpop.permute.xlu0 %629
  %631 = vrot.lane.b32.xlu0 %v545, 127
  %v632 = vpop.permute.xlu0 %631
  %633 = vrot.lane.b32.xlu0 %v542, 127
  %v634 = vpop.permute.xlu0 %633
  %635 = vrot.lane.b32.xlu0 %v546, 127
  %v636 = vpop.permute.xlu0 %635
  %637 = vrot.lane.b32.xlu0 %v543, 127
  %v638 = vpop.permute.xlu0 %637
  %639 = vrot.lane.b32.xlu0 %v547, 127
  %v640 = vpop.permute.xlu0 %639
  %641 = vrot.lane.b32.xlu0 %v544, 127
  %v642 = vpop.permute.xlu0 %641
  %643 = vrot.lane.b32.xlu0 %v548, 127
  %v644 = vpop.permute.xlu0 %643
  %v645 = vsel %vm222, %v638, %v642
  %v646 = vsel %vm222, %v640, %v644
  %v647 = vsel %vm222, %v634, %v638
  %v648 = vsel %vm222, %v636, %v640
  %v649 = vsel %vm222, %v630, %v634
  %v650 = vsel %vm222, %v632, %v636
  %v651 = vsel %vm222, %v642, %v630
  %v652 = vsel %vm222, %v644, %v632
  %v653 = vsel %vm231, %v649, 0.0
  %v654 = vsel %vm232, %v647, 0.0
  %v655 = vsel %vm233, %v645, 0.0
  %v656 = vsel %vm234, %v651, 0.0
  %v657 = vsel %vm231, %v650, 0.0
  %v658 = vsel %vm232, %v648, 0.0
  %v659 = vsel %vm233, %v646, 0.0
  %v660 = vsel %vm234, %v652, 0.0
  %661 = vst [vmem:[#allocation3 + $0x80] sm:$0xff] %v653
  %662 = vst [vmem:[#allocation3 + $0x88] sm:$0xff] %v654
  %663 = vst [vmem:[#allocation3 + $0x90] sm:$0xff] %v655
  %664 = vst [vmem:[#allocation3 + $0x98] sm:$0xff] %v656
  %665 = vst [vmem:[#allocation3 + $0xa0] sm:$0xff] %v657
  %666 = vst [vmem:[#allocation3 + $0xa8] sm:$0xff] %v658
  %667 = vst [vmem:[#allocation3 + $0xb0] sm:$0xff] %v659
  %668 = vst [vmem:[#allocation3 + $0xb8] sm:$0xff] %v660
  %669 = vrot.lane.b32.xlu0 %v509, 1
  %v670 = vpop.permute.xlu0 %669
  %671 = vrot.lane.b32.xlu0 %v513, 1
  %v672 = vpop.permute.xlu0 %671
  %673 = vrot.lane.b32.xlu0 %v510, 1
  %v674 = vpop.permute.xlu0 %673
  %675 = vrot.lane.b32.xlu0 %v514, 1
  %v676 = vpop.permute.xlu0 %675
  %677 = vrot.lane.b32.xlu0 %v511, 1
  %v678 = vpop.permute.xlu0 %677
  %679 = vrot.lane.b32.xlu0 %v515, 1
  %v680 = vpop.permute.xlu0 %679
  %681 = vrot.lane.b32.xlu0 %v512, 1
  %v682 = vpop.permute.xlu0 %681
  %683 = vrot.lane.b32.xlu0 %v516, 1
  %v684 = vpop.permute.xlu0 %683
  %v685 = vsel %vm189, %v678, %v682
  %v686 = vsel %vm189, %v680, %v684
  %v687 = vsel %vm189, %v674, %v678
  %v688 = vsel %vm189, %v676, %v680
  %v689 = vsel %vm189, %v670, %v674
  %v690 = vsel %vm189, %v672, %v676
  %v691 = vsel %vm189, %v682, %v670
  %v692 = vsel %vm189, %v684, %v672
  %v693 = vsel %vm198, %v691, 0.0
  %v694 = vsel %vm199, %v689, 0.0
  %v695 = vsel %vm200, %v687, 0.0
  %v696 = vsel %vm201, %v685, 0.0
  %v697 = vsel %vm198, %v692, 0.0
  %v698 = vsel %vm199, %v690, 0.0
  %v699 = vsel %vm200, %v688, 0.0
  %v700 = vsel %vm201, %v686, 0.0
  %701 = vst [vmem:[#allocation3 + $0xc0] sm:$0xff] %v693
  %702 = vst [vmem:[#allocation3 + $0xc8] sm:$0xff] %v694
  %703 = vst [vmem:[#allocation3 + $0xd0] sm:$0xff] %v695
  %704 = vst [vmem:[#allocation3 + $0xd8] sm:$0xff] %v696
  %705 = vst [vmem:[#allocation3 + $0xe0] sm:$0xff] %v697
  %706 = vst [vmem:[#allocation3 + $0xe8] sm:$0xff] %v698
  %707 = vst [vmem:[#allocation3 + $0xf0] sm:$0xff] %v699
  %708 = vst [vmem:[#allocation3 + $0xf8] sm:$0xff] %v700
  %709 = vst [vmem:[#allocation3 + $0x100] sm:$0xff] %v509
  %710 = vst [vmem:[#allocation3 + $0x108] sm:$0xff] %v510
  %711 = vst [vmem:[#allocation3 + $0x110] sm:$0xff] %v511
  %712 = vst [vmem:[#allocation3 + $0x118] sm:$0xff] %v512
  %713 = vst [vmem:[#allocation3 + $0x120] sm:$0xff] %v513
  %714 = vst [vmem:[#allocation3 + $0x128] sm:$0xff] %v514
  %715 = vst [vmem:[#allocation3 + $0x130] sm:$0xff] %v515
  %716 = vst [vmem:[#allocation3 + $0x138] sm:$0xff] %v516
  %717 = vrot.lane.b32.xlu0 %v509, 127
  %v718 = vpop.permute.xlu0 %717
  %719 = vrot.lane.b32.xlu0 %v513, 127
  %v720 = vpop.permute.xlu0 %719
  %721 = vrot.lane.b32.xlu0 %v510, 127
  %v722 = vpop.permute.xlu0 %721
  %723 = vrot.lane.b32.xlu0 %v514, 127
  %v724 = vpop.permute.xlu0 %723
  %725 = vrot.lane.b32.xlu0 %v511, 127
  %v726 = vpop.permute.xlu0 %725
  %727 = vrot.lane.b32.xlu0 %v515, 127
  %v728 = vpop.permute.xlu0 %727
  %729 = vrot.lane.b32.xlu0 %v512, 127
  %v730 = vpop.permute.xlu0 %729
  %731 = vrot.lane.b32.xlu0 %v516, 127
  %v732 = vpop.permute.xlu0 %731
  %v733 = vsel %vm222, %v726, %v730
  %v734 = vsel %vm222, %v728, %v732
  %v735 = vsel %vm222, %v722, %v726
  %v736 = vsel %vm222, %v724, %v728
  %v737 = vsel %vm222, %v718, %v722
  %v738 = vsel %vm222, %v720, %v724
  %v739 = vsel %vm222, %v730, %v718
  %v740 = vsel %vm222, %v732, %v720
  %v741 = vsel %vm231, %v737, 0.0
  %v742 = vsel %vm232, %v735, 0.0
  %v743 = vsel %vm233, %v733, 0.0
  %v744 = vsel %vm234, %v739, 0.0
  %v745 = vsel %vm231, %v738, 0.0
  %v746 = vsel %vm232, %v736, 0.0
  %v747 = vsel %vm233, %v734, 0.0
  %v748 = vsel %vm234, %v740, 0.0
  %749 = vst [vmem:[#allocation3 + $0x140] sm:$0xff] %v741
  %750 = vst [vmem:[#allocation3 + $0x148] sm:$0xff] %v742
  %751 = vst [vmem:[#allocation3 + $0x150] sm:$0xff] %v743
  %752 = vst [vmem:[#allocation3 + $0x158] sm:$0xff] %v744
  %753 = vst [vmem:[#allocation3 + $0x160] sm:$0xff] %v745
  %754 = vst [vmem:[#allocation3 + $0x168] sm:$0xff] %v746
  %755 = vst [vmem:[#allocation3 + $0x170] sm:$0xff] %v747
  %756 = vst [vmem:[#allocation3 + $0x178] sm:$0xff] %v748
  %757 = vrot.lane.b32.xlu0 %v573, 1
  %v758 = vpop.permute.xlu0 %757
  %759 = vrot.lane.b32.xlu0 %v577, 1
  %v760 = vpop.permute.xlu0 %759
  %761 = vrot.lane.b32.xlu0 %v574, 1
  %v762 = vpop.permute.xlu0 %761
  %763 = vrot.lane.b32.xlu0 %v578, 1
  %v764 = vpop.permute.xlu0 %763
  %765 = vrot.lane.b32.xlu0 %v575, 1
  %v766 = vpop.permute.xlu0 %765
  %767 = vrot.lane.b32.xlu0 %v579, 1
  %v768 = vpop.permute.xlu0 %767
  %769 = vrot.lane.b32.xlu0 %v576, 1
  %v770 = vpop.permute.xlu0 %769
  %771 = vrot.lane.b32.xlu0 %v580, 1
  %v772 = vpop.permute.xlu0 %771
  %v773 = vsel %vm189, %v766, %v770
  %v774 = vsel %vm189, %v768, %v772
  %v775 = vsel %vm189, %v762, %v766
  %v776 = vsel %vm189, %v764, %v768
  %v777 = vsel %vm189, %v758, %v762
  %v778 = vsel %vm189, %v760, %v764
  %v779 = vsel %vm189, %v770, %v758
  %v780 = vsel %vm189, %v772, %v760
  %v781 = vsel %vm198, %v779, 0.0
  %v782 = vsel %vm199, %v777, 0.0
  %v783 = vsel %vm200, %v775, 0.0
  %v784 = vsel %vm201, %v773, 0.0
  %v785 = vsel %vm198, %v780, 0.0
  %v786 = vsel %vm199, %v778, 0.0
  %v787 = vsel %vm200, %v776, 0.0
  %v788 = vsel %vm201, %v774, 0.0
  %789 = vst [vmem:[#allocation3 + $0x180] sm:$0xff] %v781
  %790 = vst [vmem:[#allocation3 + $0x188] sm:$0xff] %v782
  %791 = vst [vmem:[#allocation3 + $0x190] sm:$0xff] %v783
  %792 = vst [vmem:[#allocation3 + $0x198] sm:$0xff] %v784
  %793 = vst [vmem:[#allocation3 + $0x1a0] sm:$0xff] %v785
  %794 = vst [vmem:[#allocation3 + $0x1a8] sm:$0xff] %v786
  %795 = vst [vmem:[#allocation3 + $0x1b0] sm:$0xff] %v787
  %796 = vst [vmem:[#allocation3 + $0x1b8] sm:$0xff] %v788
  %797 = vst [vmem:[#allocation3 + $0x1c0] sm:$0xff] %v573
  %798 = vst [vmem:[#allocation3 + $0x1c8] sm:$0xff] %v574
  %799 = vst [vmem:[#allocation3 + $0x1d0] sm:$0xff] %v575
  %800 = vst [vmem:[#allocation3 + $0x1d8] sm:$0xff] %v576
  %801 = vst [vmem:[#allocation3 + $0x1e0] sm:$0xff] %v577
  %802 = vst [vmem:[#allocation3 + $0x1e8] sm:$0xff] %v578
  %803 = vst [vmem:[#allocation3 + $0x1f0] sm:$0xff] %v579
  %804 = vst [vmem:[#allocation3 + $0x1f8] sm:$0xff] %v580
  %805 = vrot.lane.b32.xlu0 %v573, 127
  %v806 = vpop.permute.xlu0 %805
  %807 = vrot.lane.b32.xlu0 %v577, 127
  %v808 = vpop.permute.xlu0 %807
  %809 = vrot.lane.b32.xlu0 %v574, 127
  %v810 = vpop.permute.xlu0 %809
  %811 = vrot.lane.b32.xlu0 %v578, 127
  %v812 = vpop.permute.xlu0 %811
  %813 = vrot.lane.b32.xlu0 %v575, 127
  %v814 = vpop.permute.xlu0 %813
  %815 = vrot.lane.b32.xlu0 %v579, 127
  %v816 = vpop.permute.xlu0 %815
  %817 = vrot.lane.b32.xlu0 %v576, 127
  %v818 = vpop.permute.xlu0 %817
  %819 = vrot.lane.b32.xlu0 %v580, 127
  %v820 = vpop.permute.xlu0 %819
  %v821 = vsel %vm222, %v814, %v818
  %v822 = vsel %vm222, %v816, %v820
  %v823 = vsel %vm222, %v810, %v814
  %v824 = vsel %vm222, %v812, %v816
  %v825 = vsel %vm222, %v806, %v810
  %v826 = vsel %vm222, %v808, %v812
  %v827 = vsel %vm222, %v818, %v806
  %v828 = vsel %vm222, %v820, %v808
  %v829 = vsel %vm231, %v825, 0.0
  %v830 = vsel %vm232, %v823, 0.0
  %v831 = vsel %vm233, %v821, 0.0
  %v832 = vsel %vm234, %v827, 0.0
  %v833 = vsel %vm231, %v826, 0.0
  %v834 = vsel %vm232, %v824, 0.0
  %v835 = vsel %vm233, %v822, 0.0
  %v836 = vsel %vm234, %v828, 0.0
  %837 = vst [vmem:[#allocation3 + $0x200] sm:$0xff] %v829
  %838 = vst [vmem:[#allocation3 + $0x208] sm:$0xff] %v830
  %839 = vst [vmem:[#allocation3 + $0x210] sm:$0xff] %v831
  %840 = vst [vmem:[#allocation3 + $0x218] sm:$0xff] %v832
  %841 = vst [vmem:[#allocation3 + $0x220] sm:$0xff] %v833
  %842 = vst [vmem:[#allocation3 + $0x228] sm:$0xff] %v834
  %843 = vst [vmem:[#allocation3 + $0x230] sm:$0xff] %v835
  %844 = vst [vmem:[#allocation3 + $0x238] sm:$0xff] %v836
  %v845 = vld [vmem:[%s4] sm:$0xff]
  %v846 = vld [vmem:[%s4 + $0x8] sm:$0xff]
  %v847 = vld [vmem:[#allocation3] sm:$0xff]
  %v848 = vld [vmem:[#allocation3 + $0x8] sm:$0xff]
  %v849 = vld [vmem:[#allocation3 + $0x10] sm:$0xff]
  %v850 = vld [vmem:[#allocation3 + $0x18] sm:$0xff]
  %v851 = vld [vmem:[#allocation3 + $0x20] sm:$0xff]
  %v852 = vld [vmem:[#allocation3 + $0x28] sm:$0xff]
  %v853 = vld [vmem:[#allocation3 + $0x30] sm:$0xff]
  %v854 = vld [vmem:[#allocation3 + $0x38] sm:$0xff]
  %v855 = vld [vmem:[#allocation3 + $0x40] sm:$0xff]
  %v856 = vld [vmem:[#allocation3 + $0x48] sm:$0xff]
  %v857 = vld [vmem:[#allocation3 + $0x50] sm:$0xff]
  %v858 = vld [vmem:[#allocation3 + $0x58] sm:$0xff]
  %v859 = vld [vmem:[#allocation3 + $0x60] sm:$0xff]
  %v860 = vld [vmem:[#allocation3 + $0x68] sm:$0xff]
  %v861 = vld [vmem:[#allocation3 + $0x70] sm:$0xff]
  %v862 = vld [vmem:[#allocation3 + $0x78] sm:$0xff]
  %v863 = vld [vmem:[#allocation3 + $0x80] sm:$0xff]
  %v864 = vld [vmem:[#allocation3 + $0x88] sm:$0xff]
  %v865 = vld [vmem:[#allocation3 + $0x90] sm:$0xff]
  %v866 = vld [vmem:[#allocation3 + $0x98] sm:$0xff]
  %v867 = vld [vmem:[#allocation3 + $0xa0] sm:$0xff]
  %v868 = vld [vmem:[#allocation3 + $0xa8] sm:$0xff]
  %v869 = vld [vmem:[#allocation3 + $0xb0] sm:$0xff]
  %v870 = vld [vmem:[#allocation3 + $0xb8] sm:$0xff]
  %v871 = vld [vmem:[#allocation3 + $0xc0] sm:$0xff]
  %v872 = vld [vmem:[#allocation3 + $0xc8] sm:$0xff]
  %v873 = vld [vmem:[#allocation3 + $0xd0] sm:$0xff]
  %v874 = vld [vmem:[#allocation3 + $0xd8] sm:$0xff]
  %v875 = vld [vmem:[#allocation3 + $0xe0] sm:$0xff]
  %v876 = vld [vmem:[#allocation3 + $0xe8] sm:$0xff]
  %v877 = vld [vmem:[#allocation3 + $0xf0] sm:$0xff]
  %v878 = vld [vmem:[#allocation3 + $0xf8] sm:$0xff]
  %v879 = vld [vmem:[#allocation3 + $0x100] sm:$0xff]
  %v880 = vld [vmem:[#allocation3 + $0x108] sm:$0xff]
  %v881 = vld [vmem:[#allocation3 + $0x110] sm:$0xff]
  %v882 = vld [vmem:[#allocation3 + $0x118] sm:$0xff]
  %v883 = vld [vmem:[#allocation3 + $0x120] sm:$0xff]
  %v884 = vld [vmem:[#allocation3 + $0x128] sm:$0xff]
  %v885 = vld [vmem:[#allocation3 + $0x130] sm:$0xff]
  %v886 = vld [vmem:[#allocation3 + $0x138] sm:$0xff]
  %v887 = vld [vmem:[#allocation3 + $0x140] sm:$0xff]
  %v888 = vld [vmem:[#allocation3 + $0x148] sm:$0xff]
  %v889 = vld [vmem:[#allocation3 + $0x150] sm:$0xff]
  %v890 = vld [vmem:[#allocation3 + $0x158] sm:$0xff]
  %v891 = vld [vmem:[#allocation3 + $0x160] sm:$0xff]
  %v892 = vld [vmem:[#allocation3 + $0x168] sm:$0xff]
  %v893 = vld [vmem:[#allocation3 + $0x170] sm:$0xff]
  %v894 = vld [vmem:[#allocation3 + $0x178] sm:$0xff]
  %v895 = vld [vmem:[#allocation3 + $0x180] sm:$0xff]
  %v896 = vld [vmem:[#allocation3 + $0x188] sm:$0xff]
  %v897 = vld [vmem:[#allocation3 + $0x190] sm:$0xff]
  %v898 = vld [vmem:[#allocation3 + $0x198] sm:$0xff]
  %v899 = vld [vmem:[#allocation3 + $0x1a0] sm:$0xff]
  %v900 = vld [vmem:[#allocation3 + $0x1a8] sm:$0xff]
  %v901 = vld [vmem:[#allocation3 + $0x1b0] sm:$0xff]
  %v902 = vld [vmem:[#allocation3 + $0x1b8] sm:$0xff]
  %v903 = vld [vmem:[#allocation3 + $0x1c0] sm:$0xff]
  %v904 = vld [vmem:[#allocation3 + $0x1c8] sm:$0xff]
  %v905 = vld [vmem:[#allocation3 + $0x1d0] sm:$0xff]
  %v906 = vld [vmem:[#allocation3 + $0x1d8] sm:$0xff]
  %v907 = vld [vmem:[#allocation3 + $0x1e0] sm:$0xff]
  %v908 = vld [vmem:[#allocation3 + $0x1e8] sm:$0xff]
  %v909 = vld [vmem:[#allocation3 + $0x1f0] sm:$0xff]
  %v910 = vld [vmem:[#allocation3 + $0x1f8] sm:$0xff]
  %v911 = vld [vmem:[#allocation3 + $0x200] sm:$0xff]
  %v912 = vld [vmem:[#allocation3 + $0x208] sm:$0xff]
  %v913 = vld [vmem:[#allocation3 + $0x210] sm:$0xff]
  %v914 = vld [vmem:[#allocation3 + $0x218] sm:$0xff]
  %v915 = vld [vmem:[#allocation3 + $0x220] sm:$0xff]
  %v916 = vld [vmem:[#allocation3 + $0x228] sm:$0xff]
  %v917 = vld [vmem:[#allocation3 + $0x230] sm:$0xff]
  %v918 = vld [vmem:[#allocation3 + $0x238] sm:$0xff]
  %v919 = vpack.c.bf16 %v851, %v847
  %v920 = vpack.c.bf16 %v852, %v848
  %v921 = vpack.c.bf16 %v853, %v849
  %v922 = vpack.c.bf16 %v854, %v850
  %v923 = vpack.c.bf16 %v859, %v855
  %v924 = vpack.c.bf16 %v860, %v856
  %v925 = vpack.c.bf16 %v861, %v857
  %v926 = vpack.c.bf16 %v862, %v858
  %v927 = vpack.c.bf16 %v867, %v863
  %v928 = vpack.c.bf16 %v868, %v864
  %v929 = vpack.c.bf16 %v869, %v865
  %v930 = vpack.c.bf16 %v870, %v866
  %v931 = vpack.c.bf16 %v875, %v871
  %v932 = vpack.c.bf16 %v876, %v872
  %v933 = vpack.c.bf16 %v877, %v873
  %v934 = vpack.c.bf16 %v878, %v874
  %v935 = vpack.c.bf16 %v883, %v879
  %v936 = vpack.c.bf16 %v884, %v880
  %v937 = vpack.c.bf16 %v885, %v881
  %v938 = vpack.c.bf16 %v886, %v882
  %v939 = vpack.c.bf16 %v891, %v887
  %v940 = vpack.c.bf16 %v892, %v888
  %v941 = vpack.c.bf16 %v893, %v889
  %v942 = vpack.c.bf16 %v894, %v890
  %v943 = vpack.c.bf16 %v899, %v895
  %v944 = vpack.c.bf16 %v900, %v896
  %v945 = vpack.c.bf16 %v901, %v897
  %v946 = vpack.c.bf16 %v902, %v898
  %v947 = vpack.c.bf16 %v907, %v903
  %v948 = vpack.c.bf16 %v908, %v904
  %v949 = vpack.c.bf16 %v909, %v905
  %v950 = vpack.c.bf16 %v910, %v906
  %v951 = vpack.c.bf16 %v915, %v911
  %v952 = vpack.c.bf16 %v916, %v912
  %v953 = vpack.c.bf16 %v917, %v913
  %v954 = vpack.c.bf16 %v918, %v914
  %v957 = vunpack.c.l.b16 %v845
  %v958 = vunpack.c.h.b16 %v845
  %v959 = vunpack.c.l.b16 %v846
  %v960 = vunpack.c.h.b16 %v846
  %v961 = vpack.c.b16 %v959, %v957
  %v962 = vpack.c.b16 %v960, %v958
  %vm964 = vcmask 130048
  %v966 = vsel %vm964, %v962, 0
  %968 = vmatprep.subr.bf16.mxu0 %v920
  %969 = vmatpush1.bf16.msra.mxu0 %v919
  %970 = vmatprep.subr.bf16.mxu0 %v924
  %971 = vmatpush1.bf16.msra.mxu0 %v923
  %972 = vmatprep.subr.bf16.mxu0 %v928
  %973 = vmatpush1.bf16.msra.mxu0 %v927
  %974 = vmatprep.subr.bf16.mxu0 %v932
  %975 = vmatpush1.bf16.msra.mxu0 %v931
  %976 = vmatprep.subr.bf16.mxu0 %v936
  %977 = vmatpush1.bf16.msra.mxu0 %v935
  %978 = vmatprep.subr.bf16.mxu0 %v940
  %979 = vmatpush1.bf16.msra.mxu0 %v939
  %980 = vmatprep.subr.bf16.mxu0 %v944
  %981 = vmatpush1.bf16.msra.mxu0 %v943
  %982 = vmatprep.subr.bf16.mxu0 %v948
  %983 = vmatpush1.bf16.msra.mxu0 %v947
  %984 = vmatprep.subr.bf16.mxu0 %v952
  %985 = vmatpush1.bf16.msra.mxu0 %v951
  %986 = vmatprep.subr.bf16.mxu0 0
  %987 = vmatpush1.bf16.msra.mxu0 0
  %988 = vmatprep.subr.bf16.mxu0 0
  %989 = vmatpush1.bf16.msra.mxu0 0
  %990 = vmatprep.subr.bf16.mxu0 0
  %991 = vmatpush1.bf16.msra.mxu0 0
  %992 = vmatprep.subr.bf16.mxu0 0
  %993 = vmatpush1.bf16.msra.mxu0 0
  %994 = vmatprep.subr.bf16.mxu0 0
  %995 = vmatpush1.bf16.msra.mxu0 0
  %996 = vmatprep.subr.bf16.mxu0 0
  %997 = vmatpush1.bf16.msra.mxu0 0
  %998 = vmatprep.subr.bf16.mxu0 0
  %999 = vmatpush1.bf16.msra.mxu0 0
  %1000 = vmatprep.mubr.bf16.mxu0 %v966
  %1001 = vmatmul.mubr.bf16.gmra.mrb[0].mxu0 %v961
  %v1002 = vpop.f32.mrb[0].mxu0
  %v1003 = vadd.f32 0.0, %v1002
  %v1004 = vpop.f32.mrb[0].mxu0
  %v1005 = vadd.f32 0.0, %v1004
  %v1006 = vpop.f32.mrb[0].mxu0
  %v1007 = vadd.f32 0.0, %v1006
  %v1008 = vpop.f32.mrb[0].mxu0
  %v1009 = vadd.f32 0.0, %v1008
  %1010 = vdwg.mxu0
  %1011 = vmatprep.subr.bf16.mxu0 %v922
  %1012 = vmatpush1.bf16.msra.mxu0 %v921
  %1013 = vmatprep.subr.bf16.mxu0 %v926
  %1014 = vmatpush1.bf16.msra.mxu0 %v925
  %1015 = vmatprep.subr.bf16.mxu0 %v930
  %1016 = vmatpush1.bf16.msra.mxu0 %v929
  %1017 = vmatprep.subr.bf16.mxu0 %v934
  %1018 = vmatpush1.bf16.msra.mxu0 %v933
  %1019 = vmatprep.subr.bf16.mxu0 %v938
  %1020 = vmatpush1.bf16.msra.mxu0 %v937
  %1021 = vmatprep.subr.bf16.mxu0 %v942
  %1022 = vmatpush1.bf16.msra.mxu0 %v941
  %1023 = vmatprep.subr.bf16.mxu0 %v946
  %1024 = vmatpush1.bf16.msra.mxu0 %v945
  %1025 = vmatprep.subr.bf16.mxu0 %v950
  %1026 = vmatpush1.bf16.msra.mxu0 %v949
  %1027 = vmatprep.subr.bf16.mxu0 %v954
  %1028 = vmatpush1.bf16.msra.mxu0 %v953
  %1029 = vmatprep.subr.bf16.mxu0 0
  %1030 = vmatpush1.bf16.msra.mxu0 0
  %1031 = vmatprep.subr.bf16.mxu0 0
  %1032 = vmatpush1.bf16.msra.mxu0 0
  %1033 = vmatprep.subr.bf16.mxu0 0
  %1034 = vmatpush1.bf16.msra.mxu0 0
  %1035 = vmatprep.subr.bf16.mxu0 0
  %1036 = vmatpush1.bf16.msra.mxu0 0
  %1037 = vmatprep.subr.bf16.mxu0 0
  %1038 = vmatpush1.bf16.msra.mxu0 0
  %1039 = vmatprep.subr.bf16.mxu0 0
  %1040 = vmatpush1.bf16.msra.mxu0 0
  %1041 = vmatprep.subr.bf16.mxu0 0
  %1042 = vmatpush1.bf16.msra.mxu0 0
  %1043 = vmatprep.mubr.bf16.mxu0 %v966
  %1044 = vmatmul.mubr.bf16.gmra.mrb[0].mxu0 %v961
  %v1045 = vpop.f32.mrb[0].mxu0
  %v1046 = vadd.f32 0.0, %v1045
  %v1047 = vpop.f32.mrb[0].mxu0
  %v1048 = vadd.f32 0.0, %v1047
  %v1049 = vpop.f32.mrb[0].mxu0
  %v1050 = vadd.f32 0.0, %v1049
  %v1051 = vpop.f32.mrb[0].mxu0
  %v1052 = vadd.f32 0.0, %v1051
  %1053 = vdwg.mxu0
  %v1054 = vpack.c.bf16 %v1007, %v1003
  %v1055 = vpack.c.bf16 %v1009, %v1005
  %v1056 = vpack.c.bf16 %v1050, %v1046
  %v1057 = vpack.c.bf16 %v1052, %v1048
  %v1058 = vld [vmem:[%s5] sm:$0xff]
  %v1059 = vld [vmem:[%s5 + $0x8] sm:$0xff]
  %1061 = vset.pattern.permute.xlu0 0
  %1062 = vperm.xlu0 %1061, %v1058
  %v1063 = vpop.permute.xlu0 %1062
  %1066 = vset.pattern.permute.xlu0 0
  %1067 = vperm.xlu0 %1066, %v1059
  %v1068 = vpop.permute.xlu0 %1067
  %v1134 = vunpack.c.l.b16 %v67
  %v1135 = vunpack.c.l.b16 %v68
  %v1136 = vunpack.c.l.b16 %v69
  %v1137 = vunpack.c.l.b16 %v70
  %v1138 = vunpack.c.l.b16 %v71
  %v1139 = vunpack.c.l.b16 %v72
  %v1140 = vunpack.c.l.b16 %v73
  %v1141 = vunpack.c.l.b16 %v74
  %v1142 = vunpack.c.l.b16 %v75
  %v1143 = vunpack.c.l.b16 %v76
  %v1144 = vunpack.c.l.b16 %v77
  %v1145 = vunpack.c.l.b16 %v78
  %v1146 = vunpack.c.l.b16 %v79
  %v1147 = vunpack.c.l.b16 %v80
  %v1148 = vunpack.c.l.b16 %v81
  %v1149 = vunpack.c.l.b16 %v82
  %v1150 = vunpack.c.l.b16 %v83
  %v1151 = vunpack.c.l.b16 %v84
  %v1152 = vunpack.c.l.b16 %v85
  %v1153 = vunpack.c.l.b16 %v86
  %v1154 = vunpack.c.l.b16 %v87
  %v1155 = vunpack.c.l.b16 %v88
  %v1156 = vunpack.c.l.b16 %v89
  %v1157 = vunpack.c.l.b16 %v90
  %v1158 = vunpack.c.l.b16 %v91
  %v1159 = vunpack.c.l.b16 %v92
  %v1160 = vunpack.c.l.b16 %v93
  %v1161 = vunpack.c.l.b16 %v94
  %v1162 = vunpack.c.l.b16 %v95
  %v1163 = vunpack.c.l.b16 %v96
  %v1164 = vunpack.c.l.b16 %v97
  %v1165 = vunpack.c.l.b16 %v98
  %v1166 = vunpack.c.l.b16 %v99
  %v1167 = vunpack.c.l.b16 %v100
  %v1168 = vunpack.c.l.b16 %v101
  %v1169 = vunpack.c.l.b16 %v102
  %v1170 = vunpack.c.l.b16 %v103
  %v1171 = vunpack.c.l.b16 %v104
  %v1172 = vunpack.c.l.b16 %v105
  %v1173 = vunpack.c.l.b16 %v106
  %v1174 = vunpack.c.l.b16 %v107
  %v1175 = vunpack.c.l.b16 %v108
  %v1176 = vunpack.c.l.b16 %v109
  %v1177 = vunpack.c.l.b16 %v110
  %v1178 = vunpack.c.l.b16 %v111
  %v1179 = vunpack.c.l.b16 %v112
  %v1180 = vunpack.c.l.b16 %v113
  %v1181 = vunpack.c.l.b16 %v114
  %v1182 = vunpack.c.l.b16 %v115
  %v1183 = vunpack.c.l.b16 %v116
  %v1184 = vunpack.c.l.b16 %v117
  %v1185 = vunpack.c.l.b16 %v118
  %v1186 = vunpack.c.l.b16 %v119
  %v1187 = vunpack.c.l.b16 %v120
  %v1188 = vunpack.c.l.b16 %v121
  %v1189 = vunpack.c.l.b16 %v122
  %v1190 = vunpack.c.l.b16 %v123
  %v1191 = vunpack.c.l.b16 %v124
  %v1192 = vunpack.c.l.b16 %v125
  %v1193 = vunpack.c.l.b16 %v126
  %v1194 = vunpack.c.l.b16 %v127
  %v1195 = vunpack.c.l.b16 %v128
  %v1196 = vunpack.c.l.b16 %v129
  %v1197 = vunpack.c.l.b16 %v130
  %v1198 = vpack.c.b16 %v1135, %v1134
  %v1199 = vpack.c.b16 %v1137, %v1136
  %v1200 = vpack.c.b16 %v1139, %v1138
  %v1201 = vpack.c.b16 %v1141, %v1140
  %v1202 = vpack.c.b16 %v1143, %v1142
  %v1203 = vpack.c.b16 %v1145, %v1144
  %v1204 = vpack.c.b16 %v1147, %v1146
  %v1205 = vpack.c.b16 %v1149, %v1148
  %v1206 = vpack.c.b16 %v1151, %v1150
  %v1207 = vpack.c.b16 %v1153, %v1152
  %v1208 = vpack.c.b16 %v1155, %v1154
  %v1209 = vpack.c.b16 %v1157, %v1156
  %v1210 = vpack.c.b16 %v1159, %v1158
  %v1211 = vpack.c.b16 %v1161, %v1160
  %v1212 = vpack.c.b16 %v1163, %v1162
  %v1213 = vpack.c.b16 %v1165, %v1164
  %v1214 = vpack.c.b16 %v1167, %v1166
  %v1215 = vpack.c.b16 %v1169, %v1168
  %v1216 = vpack.c.b16 %v1171, %v1170
  %v1217 = vpack.c.b16 %v1173, %v1172
  %v1218 = vpack.c.b16 %v1175, %v1174
  %v1219 = vpack.c.b16 %v1177, %v1176
  %v1220 = vpack.c.b16 %v1179, %v1178
  %v1221 = vpack.c.b16 %v1181, %v1180
  %v1222 = vpack.c.b16 %v1183, %v1182
  %v1223 = vpack.c.b16 %v1185, %v1184
  %v1224 = vpack.c.b16 %v1187, %v1186
  %v1225 = vpack.c.b16 %v1189, %v1188
  %v1226 = vpack.c.b16 %v1191, %v1190
  %v1227 = vpack.c.b16 %v1193, %v1192
  %v1228 = vpack.c.b16 %v1195, %v1194
  %v1229 = vpack.c.b16 %v1197, %v1196
  %1262 = vmatprep.subr.bf16.mxu0 0
  %1263 = vmatpush1.bf16.msra.mxu0 %v1198
  %1264 = vmatprep.subr.bf16.mxu0 0
  %1265 = vmatpush1.bf16.msra.mxu0 %v1199
  %1266 = vmatprep.subr.bf16.mxu0 0
  %1267 = vmatpush1.bf16.msra.mxu0 %v1200
  %1268 = vmatprep.subr.bf16.mxu0 0
  %1269 = vmatpush1.bf16.msra.mxu0 %v1201
  %1270 = vmatprep.subr.bf16.mxu0 0
  %1271 = vmatpush1.bf16.msra.mxu0 %v1202
  %1272 = vmatprep.subr.bf16.mxu0 0
  %1273 = vmatpush1.bf16.msra.mxu0 %v1203
  %1274 = vmatprep.subr.bf16.mxu0 0
  %1275 = vmatpush1.bf16.msra.mxu0 %v1204
  %1276 = vmatprep.subr.bf16.mxu0 0
  %1277 = vmatpush1.bf16.msra.mxu0 %v1205
  %1278 = vmatprep.subr.bf16.mxu0 0
  %1279 = vmatpush1.bf16.msra.mxu0 %v1206
  %1280 = vmatprep.subr.bf16.mxu0 0
  %1281 = vmatpush1.bf16.msra.mxu0 %v1207
  %1282 = vmatprep.subr.bf16.mxu0 0
  %1283 = vmatpush1.bf16.msra.mxu0 %v1208
  %1284 = vmatprep.subr.bf16.mxu0 0
  %1285 = vmatpush1.bf16.msra.mxu0 %v1209
  %1286 = vmatprep.subr.bf16.mxu0 0
  %1287 = vmatpush1.bf16.msra.mxu0 %v1210
  %1288 = vmatprep.subr.bf16.mxu0 0
  %1289 = vmatpush1.bf16.msra.mxu0 %v1211
  %1290 = vmatprep.subr.bf16.mxu0 0
  %1291 = vmatpush1.bf16.msra.mxu0 %v1212
  %1292 = vmatprep.subr.bf16.mxu0 0
  %1293 = vmatpush1.bf16.msra.mxu0 %v1213
  %1294 = vmatprep.mubr.bf16.mxu0 %v1055
  %1295 = vmatmul.mubr.bf16.gmra.mrb[0].mxu0 %v1054
  %v1296 = vpop.f32.mrb[0].mxu0
  %v1297 = vadd.f32 %v1063, %v1296
  %v1298 = vpop.f32.mrb[0].mxu0
  %v1299 = vpop.f32.mrb[0].mxu0
  %v1300 = vadd.f32 %v1068, %v1299
  %v1301 = vpop.f32.mrb[0].mxu0
  %1302 = vdwg.mxu0
  %1303 = vmatprep.subr.bf16.mxu0 0
  %1304 = vmatpush1.bf16.msra.mxu0 %v1214
  %1305 = vmatprep.subr.bf16.mxu0 0
  %1306 = vmatpush1.bf16.msra.mxu0 %v1215
  %1307 = vmatprep.subr.bf16.mxu0 0
  %1308 = vmatpush1.bf16.msra.mxu0 %v1216
  %1309 = vmatprep.subr.bf16.mxu0 0
  %1310 = vmatpush1.bf16.msra.mxu0 %v1217
  %1311 = vmatprep.subr.bf16.mxu0 0
  %1312 = vmatpush1.bf16.msra.mxu0 %v1218
  %1313 = vmatprep.subr.bf16.mxu0 0
  %1314 = vmatpush1.bf16.msra.mxu0 %v1219
  %1315 = vmatprep.subr.bf16.mxu0 0
  %1316 = vmatpush1.bf16.msra.mxu0 %v1220
  %1317 = vmatprep.subr.bf16.mxu0 0
  %1318 = vmatpush1.bf16.msra.mxu0 %v1221
  %1319 = vmatprep.subr.bf16.mxu0 0
  %1320 = vmatpush1.bf16.msra.mxu0 %v1222
  %1321 = vmatprep.subr.bf16.mxu0 0
  %1322 = vmatpush1.bf16.msra.mxu0 %v1223
  %1323 = vmatprep.subr.bf16.mxu0 0
  %1324 = vmatpush1.bf16.msra.mxu0 %v1224
  %1325 = vmatprep.subr.bf16.mxu0 0
  %1326 = vmatpush1.bf16.msra.mxu0 %v1225
  %1327 = vmatprep.subr.bf16.mxu0 0
  %1328 = vmatpush1.bf16.msra.mxu0 %v1226
  %1329 = vmatprep.subr.bf16.mxu0 0
  %1330 = vmatpush1.bf16.msra.mxu0 %v1227
  %1331 = vmatprep.subr.bf16.mxu0 0
  %1332 = vmatpush1.bf16.msra.mxu0 %v1228
  %1333 = vmatprep.subr.bf16.mxu0 0
  %1334 = vmatpush1.bf16.msra.mxu0 %v1229
  %1335 = vmatprep.mubr.bf16.mxu0 %v1057
  %1336 = vmatmul.mubr.bf16.gmra.mrb[0].mxu0 %v1056
  %v1337 = vpop.f32.mrb[0].mxu0
  %v1338 = vadd.f32 %v1297, %v1337
  %v1339 = vpop.f32.mrb[0].mxu0
  %v1340 = vpop.f32.mrb[0].mxu0
  %v1341 = vadd.f32 %v1300, %v1340
  %v1342 = vpop.f32.mrb[0].mxu0
  %1343 = vdwg.mxu0
  %v1344 = vpack.c.bf16 %v30, %v30
  %v1345 = vpack.c.bf16 %v31, %v31
  %v1346 = vpack.c.bf16 %v32, %v32
  %v1347 = vpack.c.bf16 %v33, %v33
  %1348 = vmatprep.subr.bf16.mxu0 0
  %1349 = vmatpush1.bf16.msra.mxu0 %v1198
  %1350 = vmatprep.subr.bf16.mxu0 0
  %1351 = vmatpush1.bf16.msra.mxu0 %v1199
  %1352 = vmatprep.subr.bf16.mxu0 0
  %1353 = vmatpush1.bf16.msra.mxu0 %v1200
  %1354 = vmatprep.subr.bf16.mxu0 0
  %1355 = vmatpush1.bf16.msra.mxu0 %v1201
  %1356 = vmatprep.subr.bf16.mxu0 0
  %1357 = vmatpush1.bf16.msra.mxu0 %v1202
  %1358 = vmatprep.subr.bf16.mxu0 0
  %1359 = vmatpush1.bf16.msra.mxu0 %v1203
  %1360 = vmatprep.subr.bf16.mxu0 0
  %1361 = vmatpush1.bf16.msra.mxu0 %v1204
  %1362 = vmatprep.subr.bf16.mxu0 0
  %1363 = vmatpush1.bf16.msra.mxu0 %v1205
  %1364 = vmatprep.subr.bf16.mxu0 0
  %1365 = vmatpush1.bf16.msra.mxu0 %v1206
  %1366 = vmatprep.subr.bf16.mxu0 0
  %1367 = vmatpush1.bf16.msra.mxu0 %v1207
  %1368 = vmatprep.subr.bf16.mxu0 0
  %1369 = vmatpush1.bf16.msra.mxu0 %v1208
  %1370 = vmatprep.subr.bf16.mxu0 0
  %1371 = vmatpush1.bf16.msra.mxu0 %v1209
  %1372 = vmatprep.subr.bf16.mxu0 0
  %1373 = vmatpush1.bf16.msra.mxu0 %v1210
  %1374 = vmatprep.subr.bf16.mxu0 0
  %1375 = vmatpush1.bf16.msra.mxu0 %v1211
  %1376 = vmatprep.subr.bf16.mxu0 0
  %1377 = vmatpush1.bf16.msra.mxu0 %v1212
  %1378 = vmatprep.subr.bf16.mxu0 0
  %1379 = vmatpush1.bf16.msra.mxu0 %v1213
  %1380 = vmatprep.mubr.bf16.mxu0 %v1345
  %1381 = vmatmul.mubr.bf16.gmra.mrb[0].mxu0 %v1344
  %v1382 = vpop.f32.mrb[0].mxu0
  %v1383 = vadd.f32 0.0, %v1382
  %v1384 = vpop.f32.mrb[0].mxu0
  %v1385 = vpop.f32.mrb[0].mxu0
  %v1386 = vpop.f32.mrb[0].mxu0
  %1387 = vdwg.mxu0
  %1388 = vmatprep.subr.bf16.mxu0 0
  %1389 = vmatpush1.bf16.msra.mxu0 %v1214
  %1390 = vmatprep.subr.bf16.mxu0 0
  %1391 = vmatpush1.bf16.msra.mxu0 %v1215
  %1392 = vmatprep.subr.bf16.mxu0 0
  %1393 = vmatpush1.bf16.msra.mxu0 %v1216
  %1394 = vmatprep.subr.bf16.mxu0 0
  %1395 = vmatpush1.bf16.msra.mxu0 %v1217
  %1396 = vmatprep.subr.bf16.mxu0 0
  %1397 = vmatpush1.bf16.msra.mxu0 %v1218
  %1398 = vmatprep.subr.bf16.mxu0 0
  %1399 = vmatpush1.bf16.msra.mxu0 %v1219
  %1400 = vmatprep.subr.bf16.mxu0 0
  %1401 = vmatpush1.bf16.msra.mxu0 %v1220
  %1402 = vmatprep.subr.bf16.mxu0 0
  %1403 = vmatpush1.bf16.msra.mxu0 %v1221
  %1404 = vmatprep.subr.bf16.mxu0 0
  %1405 = vmatpush1.bf16.msra.mxu0 %v1222
  %1406 = vmatprep.subr.bf16.mxu0 0
  %1407 = vmatpush1.bf16.msra.mxu0 %v1223
  %1408 = vmatprep.subr.bf16.mxu0 0
  %1409 = vmatpush1.bf16.msra.mxu0 %v1224
  %1410 = vmatprep.subr.bf16.mxu0 0
  %1411 = vmatpush1.bf16.msra.mxu0 %v1225
  %1412 = vmatprep.subr.bf16.mxu0 0
  %1413 = vmatpush1.bf16.msra.mxu0 %v1226
  %1414 = vmatprep.subr.bf16.mxu0 0
  %1415 = vmatpush1.bf16.msra.mxu0 %v1227
  %1416 = vmatprep.subr.bf16.mxu0 0
  %1417 = vmatpush1.bf16.msra.mxu0 %v1228
  %1418 = vmatprep.subr.bf16.mxu0 0
  %1419 = vmatpush1.bf16.msra.mxu0 %v1229
  %1420 = vmatprep.mubr.bf16.mxu0 %v1347
  %1421 = vmatmul.mubr.bf16.gmra.mrb[0].mxu0 %v1346
  %v1422 = vpop.f32.mrb[0].mxu0
  %v1423 = vadd.f32 %v1383, %v1422
  %v1424 = vpop.f32.mrb[0].mxu0
  %v1425 = vpop.f32.mrb[0].mxu0
  %v1426 = vpop.f32.mrb[0].mxu0
  %1427 = vdwg.mxu0
  %v1428 = vld [vmem:[%s6] sm:$0xf]
  %v1429 = vld [vmem:[%s6 + $0x4] sm:$0xf]
  %v1430 = vpack.c.bf16 %v1423, %v1423
  %v1431 = vld [vmem:[%s7] sm:$0xff]
  %v1432 = vld [vmem:[%s7 + $0x8] sm:$0xff]
  %1434 = vset.pattern.permute.xlu0 0
  %1435 = vperm.xlu0 %1434, %v1431
  %v1436 = vpop.permute.xlu0 %1435
  %1439 = vset.pattern.permute.xlu0 0
  %1440 = vperm.xlu0 %1439, %v1432
  %v1441 = vpop.permute.xlu0 %1440
  %v1445 = vunpack.c.l.b16 %v1428
  %v1446 = vunpack.c.l.b16 %v1429
  %v1447 = vpack.c.b16 %v1446, %v1445
  %vm1448 = vcmask 64512
  %v1450 = vsel %vm1448, %v1447, 0
  %v1453 = vsel %vm410, %v1430, 0
  %1455 = vmatprep.subr.bf16.mxu0 0
  %1456 = vmatpush1.bf16.msra.mxu0 %v1453
  %1457 = vmatprep.subr.bf16.mxu0 0
  %1458 = vmatpush1.bf16.msra.mxu0 0
  %1459 = vmatprep.subr.bf16.mxu0 0
  %1460 = vmatpush1.bf16.msra.mxu0 0
  %1461 = vmatprep.subr.bf16.mxu0 0
  %1462 = vmatpush1.bf16.msra.mxu0 0
  %1463 = vmatprep.subr.bf16.mxu0 0
  %1464 = vmatpush1.bf16.msra.mxu0 0
  %1465 = vmatprep.subr.bf16.mxu0 0
  %1466 = vmatpush1.bf16.msra.mxu0 0
  %1467 = vmatprep.subr.bf16.mxu0 0
  %1468 = vmatpush1.bf16.msra.mxu0 0
  %1469 = vmatprep.subr.bf16.mxu0 0
  %1470 = vmatpush1.bf16.msra.mxu0 0
  %1471 = vmatprep.subr.bf16.mxu0 0
  %1472 = vmatpush1.bf16.msra.mxu0 0
  %1473 = vmatprep.subr.bf16.mxu0 0
  %1474 = vmatpush1.bf16.msra.mxu0 0
  %1475 = vmatprep.subr.bf16.mxu0 0
  %1476 = vmatpush1.bf16.msra.mxu0 0
  %1477 = vmatprep.subr.bf16.mxu0 0
  %1478 = vmatpush1.bf16.msra.mxu0 0
  %1479 = vmatprep.subr.bf16.mxu0 0
  %1480 = vmatpush1.bf16.msra.mxu0 0
  %1481 = vmatprep.subr.bf16.mxu0 0
  %1482 = vmatpush1.bf16.msra.mxu0 0
  %1483 = vmatprep.subr.bf16.mxu0 0
  %1484 = vmatpush1.bf16.msra.mxu0 0
  %1485 = vmatprep.subr.bf16.mxu0 0
  %1486 = vmatpush1.bf16.msra.mxu0 0
  %1487 = vmatprep.mubr.bf16.mxu0 0
  %1488 = vmatmul.mubr.bf16.gmra.mrb[0].mxu0 %v1450
  %v1489 = vpop.f32.mrb[0].mxu0
  %v1490 = vadd.f32 %v1436, %v1489
  %v1491 = vpop.f32.mrb[0].mxu0
  %v1492 = vpop.f32.mrb[0].mxu0
  %v1493 = vadd.f32 %v1441, %v1492
  %v1494 = vpop.f32.mrb[0].mxu0
  %1495 = vdwg.mxu0
  %v1496 = vadd.f32 %v1338, %v1490
  %v1497 = vadd.f32 %v1341, %v1493
  %1498 = vst [vmem:[%s8] sm:$0xff] %v1496
  %1499 = vst [vmem:[%s8 + $0x8] sm:$0xff] %v1497
  // Predicated region
  $region34: #{optimized_dis_block_forward.1} parent=0 // pred_check
    _
  $region35: #{optimized_dis_block_forward.1} parent=0 // pred_check_branch
    %1501 = sbr.rel (0) target = $region37
  $region36: #{optimized_dis_block_forward.1} parent=0 // pred_region
    _
  $region37: #{optimized_dis_block_forward.1} parent=0 // pred_fallthru
    _
  // Predicated region
  $region38: #{optimized_dis_block_forward.1} parent=0 // pred_check
    _
  $region39: #{optimized_dis_block_forward.1} parent=0 // pred_check_branch
    %1503 = sbr.rel (0) target = $region41
  $region40: #{optimized_dis_block_forward.1} parent=0 // pred_region
    _
  $region41: #{optimized_dis_block_forward.1} parent=0 // pred_fallthru
    _

</llo_original>
